<compile_context>
chip_gen: v7x
topology: tpu7x:2x2x1
jax: 0.10.0
libtpu: 0.0.40
codegen_flags: <defaults>
</compile_context>

<pallas_src>
import numpy as np

import jax
import jax.numpy as jnp
from jax.experimental import pallas as pl
from jax.experimental.pallas import tpu as pltpu


def _sigmoid(z):
    # exp and the approximate reciprocal both land on the EUP slot (cheap vs. VPU).
    return pl.reciprocal(1.0 + jnp.exp(-z), approx=True)


def dam_kernel(x_ref, w1_ref, b1_ref, w2_ref, b2_ref, gat_ref, gmt_ref, bsp_ref, o_ref):
    # x_ref / o_ref : (1, C, HW) f32   native NCHW layout, H*W on the 128-lane axis
    # w1_ref        : (Cr, C) bf16     SE squeeze 1x1 conv, pre-scaled by 1/HW
    # b1_ref        : (Cr, 1) f32
    # w2_ref        : (C, Cr) bf16     SE excite 1x1 conv
    # b2_ref        : (C, 1)  f32
    # gat_ref       : (HW, HW) bf16    avg-branch 7x7 conv right-operator, pre-scaled 1/C
    # gmt_ref       : (HW, HW) bf16    max-branch 7x7 conv right-operator
    # bsp_ref       : (1, 1)  f32 SMEM spatial-conv bias
    x = x_ref[0].astype(jnp.float32)                                      # (C, HW)

    # ---- SEBlock: global pool over HW -> 1x1 -> ReLU -> 1x1 -> sigmoid -> scale ----
    pooled = jnp.sum(x, axis=1, keepdims=True)                            # (C, 1); 1/HW in w1
    h = jnp.dot(w1_ref[...], pooled.astype(jnp.bfloat16),
                preferred_element_type=jnp.float32) + b1_ref[...]         # (Cr, 1)
    h = jnp.maximum(h, 0.0)
    ca = jnp.dot(w2_ref[...], h.astype(jnp.bfloat16),
                 preferred_element_type=jnp.float32) + b2_ref[...]        # (C, 1)
    ca = _sigmoid(ca)
    x1 = x * ca                                                           # (C, HW)

    # ---- SpatialAttention: channel sum/max are sublane (VPU) reductions; the 7x7 conv
    #      is two lane-dense (1,HW)@(HW,HW) MXU matmuls ----
    s_c = jnp.sum(x1, axis=0, keepdims=True)                              # (1, HW); 1/C in gat
    m_c = jnp.max(x1, axis=0, keepdims=True)                              # (1, HW)
    logits = (jnp.dot(s_c.astype(jnp.bfloat16), gat_ref[...],
                      preferred_element_type=jnp.float32)
              + jnp.dot(m_c.astype(jnp.bfloat16), gmt_ref[...],
                        preferred_element_type=jnp.float32)
              + bsp_ref[0, 0])                                            # (1, HW)
    sa = _sigmoid(logits)

    o_ref[0] = (x1 * sa).astype(o_ref.dtype)


@jax.jit
def dam_forward(x_nchw, w_se1, b_se1, w_se2, b_se2, ga_t, gm_t, b_sp):
    """x_nchw: (B, C, H, W); w_se1: (Cr, C); w_se2: (C, Cr); ga_t/gm_t: (HW, HW)
    right-multiplication operators of the 7x7 'same' conv (avg / max branch).
    Returns (B, C, H, W)."""
    B, C, H, W = x_nchw.shape
    HW = H * W
    Cr = w_se1.shape[0]

    # Native layout: free reshape, no HBM transpose passes.
    x = x_nchw.reshape(B, C, HW)

    # Wrapper-side constant folding: 1/HW into the squeeze weight (kernel uses the
    # channel-sum pool), 1/C into the avg-branch operator (kernel uses the channel sum).
    w1k = (w_se1 * (1.0 / HW)).astype(jnp.bfloat16)                       # (Cr, C)
    w2k = w_se2.astype(jnp.bfloat16)                                      # (C, Cr)
    gak = (ga_t * (1.0 / C)).astype(jnp.bfloat16)                         # (HW, HW)
    gmk = gm_t.astype(jnp.bfloat16)                                       # (HW, HW)

    act_spec = pl.BlockSpec((1, C, HW), lambda b: (b, 0, 0))
    full2d = lambda shape: pl.BlockSpec(shape, lambda b: (0, 0))

    # VMEM budget: double-buffered activation tiles + grid-invariant weights + headroom
    # for in-kernel intermediates / spills.
    act_bytes = C * HW * 4
    w_bytes = 2 * HW * HW * 2 + 2 * C * Cr * 2 + (C + Cr + 1) * 4
    vmem_limit = int(2 * 2 * act_bytes + 2 * w_bytes + (4 << 20))

    cost = pl.CostEstimate(
        flops=int(B * (4 * Cr * C + 4 * HW * HW + 8 * C * HW)),
        transcendentals=int(B * (C + HW)),
        bytes_accessed=int(B * 2 * act_bytes + w_bytes),
    )

    out = pl.pallas_call(
        dam_kernel,
        out_shape=jax.ShapeDtypeStruct((B, C, HW), x.dtype),
        grid_spec=pltpu.PrefetchScalarGridSpec(
            num_scalar_prefetch=0,
            grid=(B,),
            in_specs=[
                act_spec,                                    # x
                full2d((Cr, C)),                             # w_se1 (pre-scaled)
                full2d((Cr, 1)),                             # b_se1
                full2d((C, Cr)),                             # w_se2
                full2d((C, 1)),                              # b_se2
                full2d((HW, HW)),                            # GaT (pre-scaled)
                full2d((HW, HW)),                            # GmT
                pl.BlockSpec(memory_space=pltpu.MemorySpace.SMEM),  # spatial bias
            ],
            out_specs=act_spec,
        ),
        compiler_params=pltpu.CompilerParams(
            dimension_semantics=("parallel",),
            vmem_limit_bytes=vmem_limit),
        cost_estimate=cost,
    )(x,
      w1k, b_se1.reshape(Cr, 1),
      w2k, b_se2.reshape(C, 1),
      gak, gmk,
      b_sp.reshape(1, 1).astype(jnp.float32))

    return out.reshape(B, C, H, W)


def build_spatial_conv_rhs_operators(wk, H, W):
    """Exact right-multiplication operators of Conv2d(2, 1, k, padding=k//2) acting on
    the flattened (row-major y*W+x) avg / max maps:
        logits_row(1,HW) = avg_row @ ga_t + max_row @ gm_t
    wk: (2, kh, kw).  Returns ga_t, gm_t each (HW, HW) float32."""
    wk = np.asarray(wk, dtype=np.float32)
    _, kh, kw = wk.shape
    ph, pw = kh // 2, kw // 2
    HW = H * W
    ops = np.zeros((2, HW, HW), dtype=np.float32)   # ops[c, p, q]: output p, input q
    for y in range(H):
        for x in range(W):
            p = y * W + x
            for i in range(kh):
                yin = y + i - ph
                if not (0 <= yin < H):
                    continue
                for j in range(kw):
                    xin = x + j - pw
                    if not (0 <= xin < W):
                        continue
                    q = yin * W + xin
                    ops[0, p, q] = wk[0, i, j]
                    ops[1, p, q] = wk[1, i, j]
    return np.ascontiguousarray(ops[0].T), np.ascontiguousarray(ops[1].T)


def dam_reference(x, w_se1, b_se1, w_se2, b_se2, wk, b_sp):
    """Pure-JAX NCHW reference matching the PyTorch DAM/CBAM forward (f32)."""
    # SEBlock
    pooled = jnp.mean(x, axis=(2, 3), keepdims=True)                      # (B, C, 1, 1)
    h = jnp.einsum('bcij,oc->boij', pooled, w_se1) + b_se1[None, :, None, None]
    h = jnp.maximum(h, 0.0)
    ca = jnp.einsum('bcij,oc->boij', h, w_se2) + b_se2[None, :, None, None]
    ca = jax.nn.sigmoid(ca)
    x1 = x * ca
    # SpatialAttention
    avg = jnp.mean(x1, axis=1, keepdims=True)
    mx = jnp.max(x1, axis=1, keepdims=True)
    m = jnp.concatenate([avg, mx], axis=1)                                # (B, 2, H, W)
    pad = wk.shape[-1] // 2
    dn = jax.lax.conv_dimension_numbers(m.shape, (1, 2) + wk.shape[1:],
                                        ('NCHW', 'OIHW', 'NCHW'))
    logit = jax.lax.conv_general_dilated(
        m, wk[None], (1, 1), [(pad, pad), (pad, pad)], dimension_numbers=dn) + b_sp
    sa = jax.nn.sigmoid(logit)
    return x1 * sa


if __name__ == "__main__":
    # DAM(bc=128, r=8, dim=...) — `dim` is unused by the PyTorch forward.
    # C = 128 (16 sublane groups), H*W = 256 (multiple of 128 lanes).
    B, C, H, W = 2, 128, 16, 16
    r = 8
    Cr = C // r

    key = jax.random.PRNGKey(0)
    ks = jax.random.split(key, 7)
    x = jax.random.normal(ks[0], (B, C, H, W), jnp.float32)
    # SE 1x1 convs, stored as (out, in) == PyTorch (out, in, 1, 1) squeezed.
    w_se1 = 0.2 * jax.random.normal(ks[1], (Cr, C), jnp.float32)
    b_se1 = 0.1 * jax.random.normal(ks[2], (Cr,), jnp.float32)
    w_se2 = 0.2 * jax.random.normal(ks[3], (C, Cr), jnp.float32)
    b_se2 = 0.1 * jax.random.normal(ks[4], (C,), jnp.float32)
    # Spatial 7x7 conv: PyTorch weight (1, 2, 7, 7) -> (2, 7, 7), scalar bias.
    wk = 0.1 * jax.random.normal(ks[5], (2, 7, 7), jnp.float32)
    b_sp = 0.1 * jax.random.normal(ks[6], (), jnp.float32)

    # Wrapper-side (exact) lowering of the 7x7 spatial conv to dense right-operators.
    ga_t, gm_t = build_spatial_conv_rhs_operators(np.asarray(wk), H, W)

    out = dam_forward(x, w_se1, b_se1, w_se2, b_se2,
                      jnp.asarray(ga_t), jnp.asarray(gm_t), b_sp)
    out = jax.block_until_ready(out)

    ref = dam_reference(x, w_se1, b_se1, w_se2, b_se2, wk, b_sp)
    assert out.shape == (B, C, H, W)
    max_err = jnp.max(jnp.abs(out - ref))
    # bf16 MXU operands with f32 accumulation -> loosened tolerance.
    assert jnp.allclose(out, ref, rtol=2e-2, atol=2e-2), f"max abs err = {max_err}"

    print("KERNEL_OK")
</pallas_src>

<mosaic_0001>
module attributes {stable_mosaic.version = 11 : i64} {
  func.func @dam_kernel(%arg0: i32, %arg1: memref<1x128x256xf32, #tpu.memory_space<vmem>>, %arg2: memref<16x128xbf16, #tpu.memory_space<vmem>>, %arg3: memref<16x1xf32, #tpu.memory_space<vmem>>, %arg4: memref<128x16xbf16, #tpu.memory_space<vmem>>, %arg5: memref<128x1xf32, #tpu.memory_space<vmem>>, %arg6: memref<256x256xbf16, #tpu.memory_space<vmem>>, %arg7: memref<256x256xbf16, #tpu.memory_space<vmem>>, %arg8: memref<1x1xf32, #tpu.memory_space<smem>>, %arg9: memref<1x128x256xf32, #tpu.memory_space<vmem>>) attributes {dimension_semantics = [#tpu.dimension_semantics<parallel>], iteration_bounds = array<i64: 2>, scalar_prefetch = 0 : i64, scratch_operands = 0 : i64, tpu.core_type = #tpu.core_type<tc>, window_params = [{transform_indices = @transform_0, window_bounds = array<i64: 1, 128, 256>}, {pipeline_mode = #tpu.pipeline_mode<synchronous>, transform_indices = @transform_1, window_bounds = array<i64: 16, 128>}, {pipeline_mode = #tpu.pipeline_mode<synchronous>, transform_indices = @transform_2, window_bounds = array<i64: 16, 1>}, {pipeline_mode = #tpu.pipeline_mode<synchronous>, transform_indices = @transform_3, window_bounds = array<i64: 128, 16>}, {pipeline_mode = #tpu.pipeline_mode<synchronous>, transform_indices = @transform_4, window_bounds = array<i64: 128, 1>}, {pipeline_mode = #tpu.pipeline_mode<synchronous>, transform_indices = @transform_5, window_bounds = array<i64: 256, 256>}, {pipeline_mode = #tpu.pipeline_mode<synchronous>, transform_indices = @transform_6, window_bounds = array<i64: 256, 256>}, {transform_indices = @transform_7, window_bounds = array<i64: 1, 1>}, {transform_indices = @transform_8, window_bounds = array<i64: 1, 128, 256>}]} {
    %c0 = arith.constant 0 : index
    %c0_0 = arith.constant 0 : index
    %c0_1 = arith.constant 0 : index
    %0 = vector.load %arg1[%c0, %c0_0, %c0_1] : memref<1x128x256xf32, #tpu.memory_space<vmem>>, vector<1x128x256xf32>
    %1 = vector.shape_cast %0 : vector<1x128x256xf32> to vector<128x256xf32>
    %cst = arith.constant dense<0.000000e+00> : vector<128xf32>
    %2 = vector.multi_reduction <add>, %1, %cst [1] : vector<128x256xf32> to vector<128xf32>
    %3 = vector.shape_cast %2 : vector<128xf32> to vector<128x1xf32>
    %c0_2 = arith.constant 0 : index
    %c0_3 = arith.constant 0 : index
    %4 = vector.load %arg2[%c0_2, %c0_3] : memref<16x128xbf16, #tpu.memory_space<vmem>>, vector<16x128xbf16>
    %5 = arith.truncf %3 : vector<128x1xf32> to vector<128x1xbf16>
    %cst_4 = arith.constant dense<0.000000e+00> : vector<16x1xf32>
    %6 = tpu.matmul %4, %5, %cst_4 {dimension_numbers = #tpu.dot_dimension_numbers<[1], [0], [0], [1], [0, 0, 1, 1], [], []>} : vector<16x128xbf16>, vector<128x1xbf16>, vector<16x1xf32> -> vector<16x1xf32>
    %c0_5 = arith.constant 0 : index
    %c0_6 = arith.constant 0 : index
    %7 = vector.load %arg3[%c0_5, %c0_6] : memref<16x1xf32, #tpu.memory_space<vmem>>, vector<16x1xf32>
    %8 = arith.addf %6, %7 : vector<16x1xf32>
    %cst_7 = arith.constant 0.000000e+00 : f32
    %9 = vector.broadcast %cst_7 : f32 to vector<16x1xf32>
    %10 = arith.maximumf %8, %9 : vector<16x1xf32>
    %c0_8 = arith.constant 0 : index
    %c0_9 = arith.constant 0 : index
    %11 = vector.load %arg4[%c0_8, %c0_9] : memref<128x16xbf16, #tpu.memory_space<vmem>>, vector<128x16xbf16>
    %12 = arith.truncf %10 : vector<16x1xf32> to vector<16x1xbf16>
    %cst_10 = arith.constant dense<0.000000e+00> : vector<128x1xf32>
    %13 = tpu.matmul %11, %12, %cst_10 {dimension_numbers = #tpu.dot_dimension_numbers<[1], [0], [0], [1], [0, 0, 1, 1], [], []>} : vector<128x16xbf16>, vector<16x1xbf16>, vector<128x1xf32> -> vector<128x1xf32>
    %c0_11 = arith.constant 0 : index
    %c0_12 = arith.constant 0 : index
    %14 = vector.load %arg5[%c0_11, %c0_12] : memref<128x1xf32, #tpu.memory_space<vmem>>, vector<128x1xf32>
    %15 = arith.addf %13, %14 : vector<128x1xf32>
    %cst_13 = arith.constant 0.000000e+00 : f32
    %16 = vector.broadcast %cst_13 : f32 to vector<128x1xf32>
    %17 = arith.subf %16, %15 : vector<128x1xf32>
    %18 = math.exp %17 : vector<128x1xf32>
    %cst_14 = arith.constant 1.000000e+00 : f32
    %19 = vector.broadcast %cst_14 : f32 to vector<128x1xf32>
    %20 = arith.addf %19, %18 : vector<128x1xf32>
    %21 = tpu.reciprocal %20 {approx = true} : vector<128x1xf32> -> vector<128x1xf32>
    %22 = vector.broadcast %21 : vector<128x1xf32> to vector<128x256xf32>
    %23 = arith.mulf %1, %22 : vector<128x256xf32>
    %cst_15 = arith.constant dense<0.000000e+00> : vector<256xf32>
    %24 = vector.multi_reduction <add>, %23, %cst_15 [0] : vector<128x256xf32> to vector<256xf32>
    %25 = vector.shape_cast %24 : vector<256xf32> to vector<1x256xf32>
    %cst_16 = arith.constant dense<0xFF800000> : vector<256xf32>
    %26 = vector.multi_reduction <maximumf>, %23, %cst_16 [0] : vector<128x256xf32> to vector<256xf32>
    %27 = vector.shape_cast %26 : vector<256xf32> to vector<1x256xf32>
    %28 = arith.truncf %25 : vector<1x256xf32> to vector<1x256xbf16>
    %c0_17 = arith.constant 0 : index
    %c0_18 = arith.constant 0 : index
    %29 = vector.load %arg6[%c0_17, %c0_18] : memref<256x256xbf16, #tpu.memory_space<vmem>>, vector<256x256xbf16>
    %cst_19 = arith.constant dense<0.000000e+00> : vector<1x256xf32>
    %30 = tpu.matmul %28, %29, %cst_19 {dimension_numbers = #tpu.dot_dimension_numbers<[1], [0], [0], [1], [0, 0, 1, 1], [], []>} : vector<1x256xbf16>, vector<256x256xbf16>, vector<1x256xf32> -> vector<1x256xf32>
    %31 = arith.truncf %27 : vector<1x256xf32> to vector<1x256xbf16>
    %c0_20 = arith.constant 0 : index
    %c0_21 = arith.constant 0 : index
    %32 = vector.load %arg7[%c0_20, %c0_21] : memref<256x256xbf16, #tpu.memory_space<vmem>>, vector<256x256xbf16>
    %cst_22 = arith.constant dense<0.000000e+00> : vector<1x256xf32>
    %33 = tpu.matmul %31, %32, %cst_22 {dimension_numbers = #tpu.dot_dimension_numbers<[1], [0], [0], [1], [0, 0, 1, 1], [], []>} : vector<1x256xbf16>, vector<256x256xbf16>, vector<1x256xf32> -> vector<1x256xf32>
    %34 = arith.addf %30, %33 : vector<1x256xf32>
    %c0_23 = arith.constant 0 : index
    %c0_24 = arith.constant 0 : index
    %35 = memref.load %arg8[%c0_23, %c0_24] : memref<1x1xf32, #tpu.memory_space<smem>>
    %36 = vector.broadcast %35 : f32 to vector<1x256xf32>
    %37 = arith.addf %34, %36 : vector<1x256xf32>
    %cst_25 = arith.constant 0.000000e+00 : f32
    %38 = vector.broadcast %cst_25 : f32 to vector<1x256xf32>
    %39 = arith.subf %38, %37 : vector<1x256xf32>
    %40 = math.exp %39 : vector<1x256xf32>
    %cst_26 = arith.constant 1.000000e+00 : f32
    %41 = vector.broadcast %cst_26 : f32 to vector<1x256xf32>
    %42 = arith.addf %41, %40 : vector<1x256xf32>
    %43 = tpu.reciprocal %42 {approx = true} : vector<1x256xf32> -> vector<1x256xf32>
    %44 = vector.broadcast %43 : vector<1x256xf32> to vector<128x256xf32>
    %45 = arith.mulf %23, %44 : vector<128x256xf32>
    %c0_27 = arith.constant 0 : index
    %c0_28 = arith.constant 0 : index
    %c0_29 = arith.constant 0 : index
    %46 = vector.load %arg9[%c0_27, %c0_28, %c0_29] : memref<1x128x256xf32, #tpu.memory_space<vmem>>, vector<1x128x256xf32>
    %47 = vector.shape_cast %46 : vector<1x128x256xf32> to vector<128x256xf32>
    %48 = vector.shape_cast %45 : vector<128x256xf32> to vector<1x128x256xf32>
    tpu.vector_store %arg9[%c0_27, %c0_28, %c0_29], %48 {strides = array<i32>} : memref<1x128x256xf32, #tpu.memory_space<vmem>>, vector<1x128x256xf32>,
    return
  }
  func.func @transform_0(%arg0: i32) -> (i32, i32, i32) {
    %c0_i32 = arith.constant 0 : i32
    %c0_i32_0 = arith.constant 0 : i32
    %c0_i32_1 = arith.constant 0 : i32
    return %arg0, %c0_i32, %c0_i32_0 : i32, i32, i32
  }
  func.func @transform_1(%arg0: i32) -> (i32, i32) {
    %c0_i32 = arith.constant 0 : i32
    %c0_i32_0 = arith.constant 0 : i32
    %c0_i32_1 = arith.constant 0 : i32
    return %c0_i32, %c0_i32_0 : i32, i32
  }
  func.func @transform_2(%arg0: i32) -> (i32, i32) {
    %c0_i32 = arith.constant 0 : i32
    %c0_i32_0 = arith.constant 0 : i32
    %c0_i32_1 = arith.constant 0 : i32
    return %c0_i32, %c0_i32_0 : i32, i32
  }
  func.func @transform_3(%arg0: i32) -> (i32, i32) {
    %c0_i32 = arith.constant 0 : i32
    %c0_i32_0 = arith.constant 0 : i32
    %c0_i32_1 = arith.constant 0 : i32
    return %c0_i32, %c0_i32_0 : i32, i32
  }
  func.func @transform_4(%arg0: i32) -> (i32, i32) {
    %c0_i32 = arith.constant 0 : i32
    %c0_i32_0 = arith.constant 0 : i32
    %c0_i32_1 = arith.constant 0 : i32
    return %c0_i32, %c0_i32_0 : i32, i32
  }
  func.func @transform_5(%arg0: i32) -> (i32, i32) {
    %c0_i32 = arith.constant 0 : i32
    %c0_i32_0 = arith.constant 0 : i32
    %c0_i32_1 = arith.constant 0 : i32
    return %c0_i32, %c0_i32_0 : i32, i32
  }
  func.func @transform_6(%arg0: i32) -> (i32, i32) {
    %c0_i32 = arith.constant 0 : i32
    %c0_i32_0 = arith.constant 0 : i32
    %c0_i32_1 = arith.constant 0 : i32
    return %c0_i32, %c0_i32_0 : i32, i32
  }
  func.func @transform_7(%arg0: i32) -> (i32, i32) {
    %c0_i32 = arith.constant 0 : i32
    %c0_i32_0 = arith.constant 0 : i32
    %c0_i32_1 = arith.constant 0 : i32
    return %c0_i32, %c0_i32_0 : i32, i32
  }
  func.func @transform_8(%arg0: i32) -> (i32, i32, i32) {
    %c0_i32 = arith.constant 0 : i32
    %c0_i32_0 = arith.constant 0 : i32
    %c0_i32_1 = arith.constant 0 : i32
    return %arg0, %c0_i32, %c0_i32_0 : i32, i32, i32
  }
}

</mosaic_0001>

<llo_original>
// kernel: dam_forward.1
$region0: #{dam_forward.1}
  #allocation0 [shape = 'u32[]', space=smem, size = 0x4, offset = 0x4, fixed_abs, tag = 'smem constant byte address 0x4 - core index']
  #allocation1 [shape = 'u32[144,128]{1,0:T(1,128)}', space=vmem, size = 0x12000, scoped, tag = 'internal scratch']
  #allocation2 [shape = 'f32[1,1]{1,0:T(1,128)S(6)}', space=smem, size = 0x200, scoped, tag = 'scoped memory for dam_forward.1']
  %s0 = inlined_call_operand.vmem [shape: f32[2,128,256], index: 0, kind: input, shape index: {}]
  %s1 = inlined_call_operand.vmem [shape: bf16[16,128], index: 1, kind: input, shape index: {}]
  %s2 = inlined_call_operand.vmem [shape: f32[16,1], index: 2, kind: input, shape index: {}]
  %s3 = inlined_call_operand.vmem [shape: bf16[128,16], index: 3, kind: input, shape index: {}]
  %s4 = inlined_call_operand.vmem [shape: f32[128,1], index: 4, kind: input, shape index: {}]
  %s5 = inlined_call_operand.vmem [shape: bf16[256,256], index: 5, kind: input, shape index: {}]
  %s6 = inlined_call_operand.vmem [shape: bf16[256,256], index: 6, kind: input, shape index: {}]
  %s7 = inlined_call_operand.<no memory space> [shape: f32[1,1], index: 7, kind: input, shape index: {}]
  %s8 = inlined_call_operand.vmem [shape: f32[2,128,256], index: 8, kind: output, shape index: {}]
  %s9 = sld [smem:[#allocation0]]
  $region65: #{dam_forward.1} parent=0
    _
  %s11 = ssub.s32 1, %s9
  %s12 = scalar_select 0, %s11, %s9
  %13 = sst [smem:[#allocation2]] %s7
  loop: start=0, step=1, limit=4
  $region2: #{dam_forward.1} parent=0 // loop_pre_header
    _
  $region3: #{dam_forward.1} parent=0 // loop_header
    %s15 = sphi 0, %s19
    %p16 = scmp.ge.s32.totalorder %s15, 4
    %s25 = sphi 0, %s27
    %s28 = sphi 0, %s25
    %s29 = sphi 0, %s28
    %s45 = sphi 0, %s29
    %s49 = sphi 0, %s49
    %s51 = sphi 0, %s49
    %s52 = sphi 0, %s51
    %s66 = sphi 0, %s52
    %s70 = sphi 0, %s70
    %s72 = sphi 0, %s70
    %s73 = sphi 0, %s72
    %s87 = sphi 0, %s73
    %s91 = sphi 0, %s91
    %s93 = sphi 0, %s91
    %s94 = sphi 0, %s93
    %s108 = sphi 0, %s94
    %s112 = sphi 0, %s112
    %s114 = sphi 0, %s112
    %s115 = sphi 0, %s114
    %s129 = sphi 0, %s115
    %s133 = sphi 0, %s133
    %s135 = sphi 0, %s133
    %s136 = sphi 0, %s135
    %s150 = sphi 0, %s136
    %s154 = sphi 0, %s154
    %s156 = sphi 0, %s154
    %s157 = sphi 0, %s156
    %s171 = sphi 0, %s157
    %s175 = sphi 0, %s175
    %s177 = sphi 0, %s175
    %s178 = sphi 0, %s177
    %s192 = sphi 0, %s178
    %s198 = sphi 0, %s200
    %s201 = sphi 0, %s198
    %s202 = sphi 0, %s201
    %s218 = sphi 0, %s202
  $region4: #{dam_forward.1} parent=0 // loop_header_branch
    %18 = sbr.rel (%p16) target = $region8
  $region5: #{dam_forward.1} parent=0 // loop_body
    %s20 = ssub.s32 %s15, 1
    %s21 = ssub.s32 %s15, 2
    %s22 = sadd.s32 %s15, 1
    %s23 = ssub.s32 %s15, %s22
    %p24 = scmp.eq.s32.totalorder %s23, 0
    %s26 = sadd.s32 %s25, 1
    %s27 = scalar_select %p24, %s25, %s26
    %p30 = pneg %p24
    %p31 = scmp.eq.s32.totalorder %s15, 1
    %p32 = por %p30, %p31
    %p33 = scmp.ne.s32.totalorder %s25, %s28
    %p34 = scmp.eq.s32.totalorder %s15, 0
    %p35 = por %p33, %p34
    %p36 = scmp.ne.s32.totalorder %s25, %s28
    %p37 = scmp.eq.s32.totalorder %s20, 1
    %p38 = por %p36, %p37
    %p39 = scmp.ne.s32.totalorder %s28, %s29
    %p40 = scmp.eq.s32.totalorder %s20, 0
    %p41 = por %p39, %p40
    %p42 = scmp.ne.s32.totalorder %s28, %s29
    %p43 = scmp.eq.s32.totalorder %s21, 1
    %p44 = por %p42, %p43
    %p46 = scmp.ne.s32.totalorder %s29, %s45
    %p47 = scmp.eq.s32.totalorder %s21, 0
    %p48 = por %p46, %p47
    %s50 = sadd.s32 %s49, 1
    %p53 = scmp.eq.s32.totalorder %s15, 1
    %p54 = scmp.ne.s32.totalorder %s49, %s51
    %p55 = scmp.eq.s32.totalorder %s15, 0
    %p56 = por %p54, %p55
    %p57 = scmp.ne.s32.totalorder %s49, %s51
    %p58 = scmp.eq.s32.totalorder %s20, 1
    %p59 = por %p57, %p58
    %p60 = scmp.ne.s32.totalorder %s51, %s52
    %p61 = scmp.eq.s32.totalorder %s20, 0
    %p62 = por %p60, %p61
    %p63 = scmp.ne.s32.totalorder %s51, %s52
    %p64 = scmp.eq.s32.totalorder %s21, 1
    %p65 = por %p63, %p64
    %p67 = scmp.ne.s32.totalorder %s52, %s66
    %p68 = scmp.eq.s32.totalorder %s21, 0
    %p69 = por %p67, %p68
    %s71 = sadd.s32 %s70, 1
    %p74 = scmp.eq.s32.totalorder %s15, 1
    %p75 = scmp.ne.s32.totalorder %s70, %s72
    %p76 = scmp.eq.s32.totalorder %s15, 0
    %p77 = por %p75, %p76
    %p78 = scmp.ne.s32.totalorder %s70, %s72
    %p79 = scmp.eq.s32.totalorder %s20, 1
    %p80 = por %p78, %p79
    %p81 = scmp.ne.s32.totalorder %s72, %s73
    %p82 = scmp.eq.s32.totalorder %s20, 0
    %p83 = por %p81, %p82
    %p84 = scmp.ne.s32.totalorder %s72, %s73
    %p85 = scmp.eq.s32.totalorder %s21, 1
    %p86 = por %p84, %p85
    %p88 = scmp.ne.s32.totalorder %s73, %s87
    %p89 = scmp.eq.s32.totalorder %s21, 0
    %p90 = por %p88, %p89
    %s92 = sadd.s32 %s91, 1
    %p95 = scmp.eq.s32.totalorder %s15, 1
    %p96 = scmp.ne.s32.totalorder %s91, %s93
    %p97 = scmp.eq.s32.totalorder %s15, 0
    %p98 = por %p96, %p97
    %p99 = scmp.ne.s32.totalorder %s91, %s93
    %p100 = scmp.eq.s32.totalorder %s20, 1
    %p101 = por %p99, %p100
    %p102 = scmp.ne.s32.totalorder %s93, %s94
    %p103 = scmp.eq.s32.totalorder %s20, 0
    %p104 = por %p102, %p103
    %p105 = scmp.ne.s32.totalorder %s93, %s94
    %p106 = scmp.eq.s32.totalorder %s21, 1
    %p107 = por %p105, %p106
    %p109 = scmp.ne.s32.totalorder %s94, %s108
    %p110 = scmp.eq.s32.totalorder %s21, 0
    %p111 = por %p109, %p110
    %s113 = sadd.s32 %s112, 1
    %p116 = scmp.eq.s32.totalorder %s15, 1
    %p117 = scmp.ne.s32.totalorder %s112, %s114
    %p118 = scmp.eq.s32.totalorder %s15, 0
    %p119 = por %p117, %p118
    %p120 = scmp.ne.s32.totalorder %s112, %s114
    %p121 = scmp.eq.s32.totalorder %s20, 1
    %p122 = por %p120, %p121
    %p123 = scmp.ne.s32.totalorder %s114, %s115
    %p124 = scmp.eq.s32.totalorder %s20, 0
    %p125 = por %p123, %p124
    %p126 = scmp.ne.s32.totalorder %s114, %s115
    %p127 = scmp.eq.s32.totalorder %s21, 1
    %p128 = por %p126, %p127
    %p130 = scmp.ne.s32.totalorder %s115, %s129
    %p131 = scmp.eq.s32.totalorder %s21, 0
    %p132 = por %p130, %p131
    %s134 = sadd.s32 %s133, 1
    %p137 = scmp.eq.s32.totalorder %s15, 1
    %p138 = scmp.ne.s32.totalorder %s133, %s135
    %p139 = scmp.eq.s32.totalorder %s15, 0
    %p140 = por %p138, %p139
    %p141 = scmp.ne.s32.totalorder %s133, %s135
    %p142 = scmp.eq.s32.totalorder %s20, 1
    %p143 = por %p141, %p142
    %p144 = scmp.ne.s32.totalorder %s135, %s136
    %p145 = scmp.eq.s32.totalorder %s20, 0
    %p146 = por %p144, %p145
    %p147 = scmp.ne.s32.totalorder %s135, %s136
    %p148 = scmp.eq.s32.totalorder %s21, 1
    %p149 = por %p147, %p148
    %p151 = scmp.ne.s32.totalorder %s136, %s150
    %p152 = scmp.eq.s32.totalorder %s21, 0
    %p153 = por %p151, %p152
    %s155 = sadd.s32 %s154, 1
    %p158 = scmp.eq.s32.totalorder %s15, 1
    %p159 = scmp.ne.s32.totalorder %s154, %s156
    %p160 = scmp.eq.s32.totalorder %s15, 0
    %p161 = por %p159, %p160
    %p162 = scmp.ne.s32.totalorder %s154, %s156
    %p163 = scmp.eq.s32.totalorder %s20, 1
    %p164 = por %p162, %p163
    %p165 = scmp.ne.s32.totalorder %s156, %s157
    %p166 = scmp.eq.s32.totalorder %s20, 0
    %p167 = por %p165, %p166
    %p168 = scmp.ne.s32.totalorder %s156, %s157
    %p169 = scmp.eq.s32.totalorder %s21, 1
    %p170 = por %p168, %p169
    %p172 = scmp.ne.s32.totalorder %s157, %s171
    %p173 = scmp.eq.s32.totalorder %s21, 0
    %p174 = por %p172, %p173
    %s176 = sadd.s32 %s175, 1
    %p179 = scmp.eq.s32.totalorder %s15, 1
    %p180 = scmp.ne.s32.totalorder %s175, %s177
    %p181 = scmp.eq.s32.totalorder %s15, 0
    %p182 = por %p180, %p181
    %p183 = scmp.ne.s32.totalorder %s175, %s177
    %p184 = scmp.eq.s32.totalorder %s20, 1
    %p185 = por %p183, %p184
    %p186 = scmp.ne.s32.totalorder %s177, %s178
    %p187 = scmp.eq.s32.totalorder %s20, 0
    %p188 = por %p186, %p187
    %p189 = scmp.ne.s32.totalorder %s177, %s178
    %p190 = scmp.eq.s32.totalorder %s21, 1
    %p191 = por %p189, %p190
    %p193 = scmp.ne.s32.totalorder %s178, %s192
    %p194 = scmp.eq.s32.totalorder %s21, 0
    %p195 = por %p193, %p194
    %s196 = ssub.s32 %s15, %s22
    %p197 = scmp.eq.s32.totalorder %s196, 0
    %s199 = sadd.s32 %s198, 1
    %s200 = scalar_select %p197, %s198, %s199
    %p203 = pneg %p197
    %p204 = scmp.eq.s32.totalorder %s15, 1
    %p205 = por %p203, %p204
    %p206 = scmp.ne.s32.totalorder %s198, %s201
    %p207 = scmp.eq.s32.totalorder %s15, 0
    %p208 = por %p206, %p207
    %p209 = scmp.ne.s32.totalorder %s198, %s201
    %p210 = scmp.eq.s32.totalorder %s20, 1
    %p211 = por %p209, %p210
    %p212 = scmp.ne.s32.totalorder %s201, %s202
    %p213 = scmp.eq.s32.totalorder %s20, 0
    %p214 = por %p212, %p213
    %p215 = scmp.ne.s32.totalorder %s201, %s202
    %p216 = scmp.eq.s32.totalorder %s21, 1
    %p217 = por %p215, %p216
    %p219 = scmp.ne.s32.totalorder %s202, %s218
    %p220 = scmp.eq.s32.totalorder %s21, 0
    %p221 = por %p219, %p220
    %p222 = scmp.le.s32.totalorder 1, %s15
    %p223 = scmp.lt.s32.totalorder %s15, 3
    %p224 = pnand %p222, %p223
    %p225 = pneg %p224
    // Predicated region
    $region9: #{dam_forward.1} parent=5 // pred_check
      _
    $region10: #{dam_forward.1} parent=5 // pred_check_branch
      %227 = sbr.rel (%p224) target = $region12
    $region11: #{dam_forward.1} parent=5 // pred_region
      %s228 = ssub.s32 %s15, 1
      // Predicated region
      $region13: #{dam_forward.1} parent=11 // pred_check
        %p229 = pneg %p62
      $region14: #{dam_forward.1} parent=11 // pred_check_branch
        %231 = sbr.rel (%p229) target = $region16
      $region15: #{dam_forward.1} parent=11 // pred_region
        _
      $region16: #{dam_forward.1} parent=11 // pred_fallthru
        _
      // Predicated region
      $region17: #{dam_forward.1} parent=11 // pred_check
        %p232 = pneg %p83
      $region18: #{dam_forward.1} parent=11 // pred_check_branch
        %234 = sbr.rel (%p232) target = $region20
      $region19: #{dam_forward.1} parent=11 // pred_region
        _
      $region20: #{dam_forward.1} parent=11 // pred_fallthru
        _
      // Predicated region
      $region21: #{dam_forward.1} parent=11 // pred_check
        %p235 = pneg %p104
      $region22: #{dam_forward.1} parent=11 // pred_check_branch
        %237 = sbr.rel (%p235) target = $region24
      $region23: #{dam_forward.1} parent=11 // pred_region
        _
      $region24: #{dam_forward.1} parent=11 // pred_fallthru
        _
      // Predicated region
      $region25: #{dam_forward.1} parent=11 // pred_check
        %p238 = pneg %p125
      $region26: #{dam_forward.1} parent=11 // pred_check_branch
        %240 = sbr.rel (%p238) target = $region28
      $region27: #{dam_forward.1} parent=11 // pred_region
        _
      $region28: #{dam_forward.1} parent=11 // pred_fallthru
        _
      // Predicated region
      $region29: #{dam_forward.1} parent=11 // pred_check
        %p241 = pneg %p146
      $region30: #{dam_forward.1} parent=11 // pred_check_branch
        %243 = sbr.rel (%p241) target = $region32
      $region31: #{dam_forward.1} parent=11 // pred_region
        _
      $region32: #{dam_forward.1} parent=11 // pred_fallthru
        _
      // Predicated region
      $region33: #{dam_forward.1} parent=11 // pred_check
        %p244 = pneg %p167
      $region34: #{dam_forward.1} parent=11 // pred_check_branch
        %246 = sbr.rel (%p244) target = $region36
      $region35: #{dam_forward.1} parent=11 // pred_region
        _
      $region36: #{dam_forward.1} parent=11 // pred_fallthru
        _
      // Predicated region
      $region37: #{dam_forward.1} parent=11 // pred_check
        %p247 = pneg %p188
      $region38: #{dam_forward.1} parent=11 // pred_check_branch
        %249 = sbr.rel (%p247) target = $region40
      $region39: #{dam_forward.1} parent=11 // pred_region
        _
      $region40: #{dam_forward.1} parent=11 // pred_fallthru
        _
    $region12: #{dam_forward.1} parent=5 // pred_fallthru
      _
    %p250 = scmp.lt.s32.totalorder %s15, 2
    // Predicated region
    $region41: #{dam_forward.1} parent=5 // pred_check
      %p251 = pneg %p250
    $region42: #{dam_forward.1} parent=5 // pred_check_branch
      %253 = sbr.rel (%p251) target = $region44
    $region43: #{dam_forward.1} parent=5 // pred_region
      // Predicated region
      $region45: #{dam_forward.1} parent=43 // pred_check
        %p254 = pneg %p35
      $region46: #{dam_forward.1} parent=43 // pred_check_branch
        %256 = sbr.rel (%p254) target = $region48
      $region47: #{dam_forward.1} parent=43 // pred_region
        %p257 = scmp.lt.s32.totalorder %s15, 1
        %s258 = scalar_select %p257, %s15, 1
        %s259 = smul.addr %s258, 32
        %s260 = smul.addr %s259, 8
        %s261 = scalar_lea.vmem %s0, %s260
      $region48: #{dam_forward.1} parent=43 // pred_fallthru
        _
    $region44: #{dam_forward.1} parent=5 // pred_fallthru
      _
    %p262 = scmp.le.s32.totalorder 1, %s15
    %p263 = scmp.lt.s32.totalorder %s15, 3
    %p264 = pnand %p262, %p263
    %p265 = pneg %p264
    // Predicated region
    $region49: #{dam_forward.1} parent=5 // pred_check
      _
    $region50: #{dam_forward.1} parent=5 // pred_check_branch
      %267 = sbr.rel (%p264) target = $region52
    $region51: #{dam_forward.1} parent=5 // pred_region
      %s268 = ssub.s32 %s15, 1
      %p269 = scmp.lt.s32.totalorder %s20, 1
      %s270 = scalar_select %p269, %s20, 1
      %s271 = smul.addr %s270, 32
      %s272 = smul.addr %s271, 8
      %s273 = scalar_lea.vmem %s0, %s272
      %p274 = pneg %p41
      %p275 = pneg %p38
      %p276 = pneg %p62
      %p277 = pneg %p59
      %p278 = pneg %p83
      %p279 = pneg %p80
      %p280 = pneg %p104
      %p281 = pneg %p101
      %p282 = pneg %p125
      %p283 = pneg %p122
      %p284 = pneg %p146
      %p285 = pneg %p143
      %p286 = pneg %p167
      %p287 = pneg %p164
      %p288 = pneg %p188
      %p289 = pneg %p185
      %p290 = pneg %p214
      %p291 = pneg %p211
      %p292 = scmp.lt.s32.totalorder %s20, 1
      %s293 = scalar_select %p292, %s20, 1
      %s294 = smul.addr %s293, 32
      %s295 = smul.addr %s294, 8
      %s296 = scalar_lea.vmem %s8, %s295
      %p297 = scmp.lt.s32.totalorder %s20, 1
      %s298 = scalar_select %p297, %s20, 1
      %s299 = smul.addr %s298, 32
      %s300 = smul.addr %s299, 8
      %s301 = scalar_lea.vmem %s0, %s300
      %p302 = scmp.lt.s32.totalorder %s20, 1
      %s303 = scalar_select %p302, %s20, 1
      %s304 = smul.addr %s303, 32
      %s305 = smul.addr %s304, 8
      %s306 = scalar_lea.vmem %s8, %s305
      %v308 = vld [vmem:[%s301] sm:$0xff]
      %v309 = vld [vmem:[%s301 + $0x8] sm:$0xff]
      %v310 = vld [vmem:[%s301 + $0x10] sm:$0xff]
      %v311 = vld [vmem:[%s301 + $0x18] sm:$0xff]
      %v312 = vld [vmem:[%s301 + $0x20] sm:$0xff]
      %v313 = vld [vmem:[%s301 + $0x28] sm:$0xff]
      %v314 = vld [vmem:[%s301 + $0x30] sm:$0xff]
      %v315 = vld [vmem:[%s301 + $0x38] sm:$0xff]
      %v316 = vld [vmem:[%s301 + $0x40] sm:$0xff]
      %v317 = vld [vmem:[%s301 + $0x48] sm:$0xff]
      %v318 = vld [vmem:[%s301 + $0x50] sm:$0xff]
      %v319 = vld [vmem:[%s301 + $0x58] sm:$0xff]
      %v320 = vld [vmem:[%s301 + $0x60] sm:$0xff]
      %v321 = vld [vmem:[%s301 + $0x68] sm:$0xff]
      %v322 = vld [vmem:[%s301 + $0x70] sm:$0xff]
      %v323 = vld [vmem:[%s301 + $0x78] sm:$0xff]
      %v324 = vld [vmem:[%s301 + $0x80] sm:$0xff]
      %v325 = vld [vmem:[%s301 + $0x88] sm:$0xff]
      %v326 = vld [vmem:[%s301 + $0x90] sm:$0xff]
      %v327 = vld [vmem:[%s301 + $0x98] sm:$0xff]
      %v328 = vld [vmem:[%s301 + $0xa0] sm:$0xff]
      %v329 = vld [vmem:[%s301 + $0xa8] sm:$0xff]
      %v330 = vld [vmem:[%s301 + $0xb0] sm:$0xff]
      %v331 = vld [vmem:[%s301 + $0xb8] sm:$0xff]
      %v332 = vld [vmem:[%s301 + $0xc0] sm:$0xff]
      %v333 = vld [vmem:[%s301 + $0xc8] sm:$0xff]
      %v334 = vld [vmem:[%s301 + $0xd0] sm:$0xff]
      %v335 = vld [vmem:[%s301 + $0xd8] sm:$0xff]
      %v336 = vld [vmem:[%s301 + $0xe0] sm:$0xff]
      %v337 = vld [vmem:[%s301 + $0xe8] sm:$0xff]
      %v338 = vld [vmem:[%s301 + $0xf0] sm:$0xff]
      %v339 = vld [vmem:[%s301 + $0xf8] sm:$0xff]
      %v340 = vadd.f32 %v308, %v309
      %341 = vadd.xlane.f32.xlu0 %v340
      %v342 = vpop.xlane.xlu0 %341
      %v343 = vadd.f32 %v310, %v311
      %344 = vadd.xlane.f32.xlu0 %v343
      %v345 = vpop.xlane.xlu0 %344
      %v346 = vadd.f32 %v312, %v313
      %347 = vadd.xlane.f32.xlu0 %v346
      %v348 = vpop.xlane.xlu0 %347
      %v349 = vadd.f32 %v314, %v315
      %350 = vadd.xlane.f32.xlu0 %v349
      %v351 = vpop.xlane.xlu0 %350
      %v352 = vadd.f32 %v316, %v317
      %353 = vadd.xlane.f32.xlu0 %v352
      %v354 = vpop.xlane.xlu0 %353
      %v355 = vadd.f32 %v318, %v319
      %356 = vadd.xlane.f32.xlu0 %v355
      %v357 = vpop.xlane.xlu0 %356
      %v358 = vadd.f32 %v320, %v321
      %359 = vadd.xlane.f32.xlu0 %v358
      %v360 = vpop.xlane.xlu0 %359
      %v361 = vadd.f32 %v322, %v323
      %362 = vadd.xlane.f32.xlu0 %v361
      %v363 = vpop.xlane.xlu0 %362
      %v364 = vadd.f32 %v324, %v325
      %365 = vadd.xlane.f32.xlu0 %v364
      %v366 = vpop.xlane.xlu0 %365
      %v367 = vadd.f32 %v326, %v327
      %368 = vadd.xlane.f32.xlu0 %v367
      %v369 = vpop.xlane.xlu0 %368
      %v370 = vadd.f32 %v328, %v329
      %371 = vadd.xlane.f32.xlu0 %v370
      %v372 = vpop.xlane.xlu0 %371
      %v373 = vadd.f32 %v330, %v331
      %374 = vadd.xlane.f32.xlu0 %v373
      %v375 = vpop.xlane.xlu0 %374
      %v376 = vadd.f32 %v332, %v333
      %377 = vadd.xlane.f32.xlu0 %v376
      %v378 = vpop.xlane.xlu0 %377
      %v379 = vadd.f32 %v334, %v335
      %380 = vadd.xlane.f32.xlu0 %v379
      %v381 = vpop.xlane.xlu0 %380
      %v382 = vadd.f32 %v336, %v337
      %383 = vadd.xlane.f32.xlu0 %v382
      %v384 = vpop.xlane.xlu0 %383
      %v385 = vadd.f32 %v338, %v339
      %386 = vadd.xlane.f32.xlu0 %v385
      %v387 = vpop.xlane.xlu0 %386
      %v388 = vld [vmem:[%s1] sm:$0xf]
      %v389 = vld [vmem:[%s1 + $0x4] sm:$0xf]
      %v390 = vpack.c.bf16 %v345, %v342
      %v391 = vpack.c.bf16 %v351, %v348
      %v392 = vpack.c.bf16 %v357, %v354
      %v393 = vpack.c.bf16 %v363, %v360
      %v394 = vpack.c.bf16 %v369, %v366
      %v395 = vpack.c.bf16 %v375, %v372
      %v396 = vpack.c.bf16 %v381, %v378
      %v397 = vpack.c.bf16 %v387, %v384
      %v398 = vld [vmem:[%s2] sm:$0xff]
      %v399 = vld [vmem:[%s2 + $0x8] sm:$0xff]
      %v402 = vunpack.c.l.b16 %v388
      %v403 = vunpack.c.l.b16 %v389
      %v404 = vpack.c.b16 %v403, %v402
      %406 = vmatprep.subr.bf16.mxu0 0
      %407 = vmatpush1.bf16.msra.mxu0 %v390
      %408 = vmatprep.subr.bf16.mxu0 0
      %409 = vmatpush1.bf16.msra.mxu0 %v391
      %410 = vmatprep.subr.bf16.mxu0 0
      %411 = vmatpush1.bf16.msra.mxu0 %v392
      %412 = vmatprep.subr.bf16.mxu0 0
      %413 = vmatpush1.bf16.msra.mxu0 %v393
      %414 = vmatprep.subr.bf16.mxu0 0
      %415 = vmatpush1.bf16.msra.mxu0 %v394
      %416 = vmatprep.subr.bf16.mxu0 0
      %417 = vmatpush1.bf16.msra.mxu0 %v395
      %418 = vmatprep.subr.bf16.mxu0 0
      %419 = vmatpush1.bf16.msra.mxu0 %v396
      %420 = vmatprep.subr.bf16.mxu0 0
      %421 = vmatpush1.bf16.msra.mxu0 %v397
      %422 = vmatprep.subr.bf16.mxu0 0
      %423 = vmatpush1.bf16.msra.mxu0 0
      %424 = vmatprep.subr.bf16.mxu0 0
      %425 = vmatpush1.bf16.msra.mxu0 0
      %426 = vmatprep.subr.bf16.mxu0 0
      %427 = vmatpush1.bf16.msra.mxu0 0
      %428 = vmatprep.subr.bf16.mxu0 0
      %429 = vmatpush1.bf16.msra.mxu0 0
      %430 = vmatprep.subr.bf16.mxu0 0
      %431 = vmatpush1.bf16.msra.mxu0 0
      %432 = vmatprep.subr.bf16.mxu0 0
      %433 = vmatpush1.bf16.msra.mxu0 0
      %434 = vmatprep.subr.bf16.mxu0 0
      %435 = vmatpush1.bf16.msra.mxu0 0
      %436 = vmatprep.subr.bf16.mxu0 0
      %437 = vmatpush1.bf16.msra.mxu0 0
      %438 = vmatprep.mubr.bf16.mxu0 0
      %439 = vmatmul.mubr.bf16.gmra.mrb[0].mxu0 %v404
      %v440 = vpop.f32.mrb[0].mxu0
      %v441 = vadd.f32 %v398, %v440
      %v442 = vpop.f32.mrb[0].mxu0
      %v443 = vpop.f32.mrb[0].mxu0
      %v444 = vadd.f32 %v399, %v443
      %v445 = vpop.f32.mrb[0].mxu0
      %446 = vdwg.mxu0
      %v447 = vmax.f32 %v441, 0.0
      %v448 = vmax.f32 %v444, 0.0
      %v449 = vld [vmem:[%s3] sm:$0xf]
      %v450 = vld [vmem:[%s3 + $0x4] sm:$0xf]
      %v451 = vld [vmem:[%s3 + $0x8] sm:$0xf]
      %v452 = vld [vmem:[%s3 + $0xc] sm:$0xf]
      %v453 = vld [vmem:[%s3 + $0x10] sm:$0xf]
      %v454 = vld [vmem:[%s3 + $0x14] sm:$0xf]
      %v455 = vld [vmem:[%s3 + $0x18] sm:$0xf]
      %v456 = vld [vmem:[%s3 + $0x1c] sm:$0xf]
      %v457 = vld [vmem:[%s3 + $0x20] sm:$0xf]
      %v458 = vld [vmem:[%s3 + $0x24] sm:$0xf]
      %v459 = vld [vmem:[%s3 + $0x28] sm:$0xf]
      %v460 = vld [vmem:[%s3 + $0x2c] sm:$0xf]
      %v461 = vld [vmem:[%s3 + $0x30] sm:$0xf]
      %v462 = vld [vmem:[%s3 + $0x34] sm:$0xf]
      %v463 = vld [vmem:[%s3 + $0x38] sm:$0xf]
      %v464 = vld [vmem:[%s3 + $0x3c] sm:$0xf]
      %v465 = vpack.c.bf16 %v448, %v447
      %v466 = vld [vmem:[%s4] sm:$0xff]
      %v467 = vld [vmem:[%s4 + $0x8] sm:$0xff]
      %v468 = vld [vmem:[%s4 + $0x10] sm:$0xff]
      %v469 = vld [vmem:[%s4 + $0x18] sm:$0xff]
      %v470 = vld [vmem:[%s4 + $0x20] sm:$0xff]
      %v471 = vld [vmem:[%s4 + $0x28] sm:$0xff]
      %v472 = vld [vmem:[%s4 + $0x30] sm:$0xff]
      %v473 = vld [vmem:[%s4 + $0x38] sm:$0xff]
      %v474 = vld [vmem:[%s4 + $0x40] sm:$0xff]
      %v475 = vld [vmem:[%s4 + $0x48] sm:$0xff]
      %v476 = vld [vmem:[%s4 + $0x50] sm:$0xff]
      %v477 = vld [vmem:[%s4 + $0x58] sm:$0xff]
      %v478 = vld [vmem:[%s4 + $0x60] sm:$0xff]
      %v479 = vld [vmem:[%s4 + $0x68] sm:$0xff]
      %v480 = vld [vmem:[%s4 + $0x70] sm:$0xff]
      %v481 = vld [vmem:[%s4 + $0x78] sm:$0xff]
      %v498 = vunpack.c.l.b16 %v449
      %v499 = vunpack.c.l.b16 %v450
      %v500 = vunpack.c.l.b16 %v451
      %v501 = vunpack.c.l.b16 %v452
      %v502 = vunpack.c.l.b16 %v453
      %v503 = vunpack.c.l.b16 %v454
      %v504 = vunpack.c.l.b16 %v455
      %v505 = vunpack.c.l.b16 %v456
      %v506 = vunpack.c.l.b16 %v457
      %v507 = vunpack.c.l.b16 %v458
      %v508 = vunpack.c.l.b16 %v459
      %v509 = vunpack.c.l.b16 %v460
      %v510 = vunpack.c.l.b16 %v461
      %v511 = vunpack.c.l.b16 %v462
      %v512 = vunpack.c.l.b16 %v463
      %v513 = vunpack.c.l.b16 %v464
      %v514 = vpack.c.b16 %v499, %v498
      %v515 = vpack.c.b16 %v501, %v500
      %v516 = vpack.c.b16 %v503, %v502
      %v517 = vpack.c.b16 %v505, %v504
      %v518 = vpack.c.b16 %v507, %v506
      %v519 = vpack.c.b16 %v509, %v508
      %v520 = vpack.c.b16 %v511, %v510
      %v521 = vpack.c.b16 %v513, %v512
      %vm522 = vcmask 130048
      %v524 = vsel %vm522, %v514, 0
      %v527 = vsel %vm522, %v515, 0
      %v530 = vsel %vm522, %v516, 0
      %v533 = vsel %vm522, %v517, 0
      %v536 = vsel %vm522, %v518, 0
      %v539 = vsel %vm522, %v519, 0
      %v542 = vsel %vm522, %v520, 0
      %v545 = vsel %vm522, %v521, 0
      %547 = vmatprep.subr.bf16.mxu0 0
      %548 = vmatpush1.bf16.msra.mxu0 %v465
      %549 = vmatprep.subr.bf16.mxu0 0
      %550 = vmatpush1.bf16.msra.mxu0 0
      %551 = vmatprep.subr.bf16.mxu0 0
      %552 = vmatpush1.bf16.msra.mxu0 0
      %553 = vmatprep.subr.bf16.mxu0 0
      %554 = vmatpush1.bf16.msra.mxu0 0
      %555 = vmatprep.subr.bf16.mxu0 0
      %556 = vmatpush1.bf16.msra.mxu0 0
      %557 = vmatprep.subr.bf16.mxu0 0
      %558 = vmatpush1.bf16.msra.mxu0 0
      %559 = vmatprep.subr.bf16.mxu0 0
      %560 = vmatpush1.bf16.msra.mxu0 0
      %561 = vmatprep.subr.bf16.mxu0 0
      %562 = vmatpush1.bf16.msra.mxu0 0
      %563 = vmatprep.subr.bf16.mxu0 0
      %564 = vmatpush1.bf16.msra.mxu0 0
      %565 = vmatprep.subr.bf16.mxu0 0
      %566 = vmatpush1.bf16.msra.mxu0 0
      %567 = vmatprep.subr.bf16.mxu0 0
      %568 = vmatpush1.bf16.msra.mxu0 0
      %569 = vmatprep.subr.bf16.mxu0 0
      %570 = vmatpush1.bf16.msra.mxu0 0
      %571 = vmatprep.subr.bf16.mxu0 0
      %572 = vmatpush1.bf16.msra.mxu0 0
      %573 = vmatprep.subr.bf16.mxu0 0
      %574 = vmatpush1.bf16.msra.mxu0 0
      %575 = vmatprep.subr.bf16.mxu0 0
      %576 = vmatpush1.bf16.msra.mxu0 0
      %577 = vmatprep.subr.bf16.mxu0 0
      %578 = vmatpush1.bf16.msra.mxu0 0
      %579 = vmatprep.mubr.bf16.mxu0 0
      %580 = vmatmul.mubr.bf16.gmra.mrb[0].mxu0 %v524
      %v581 = vpop.f32.mrb[0].mxu0
      %v582 = vadd.f32 %v466, %v581
      %v583 = vpop.f32.mrb[0].mxu0
      %v584 = vpop.f32.mrb[0].mxu0
      %v585 = vadd.f32 %v467, %v584
      %v586 = vpop.f32.mrb[0].mxu0
      %587 = vmatprep.mubr.bf16.mxu0 0
      %588 = vmatmul.mubr.bf16.gmra.mrb[0].mxu0 %v527
      %v589 = vpop.f32.mrb[0].mxu0
      %v590 = vadd.f32 %v468, %v589
      %v591 = vpop.f32.mrb[0].mxu0
      %v592 = vpop.f32.mrb[0].mxu0
      %v593 = vadd.f32 %v469, %v592
      %v594 = vpop.f32.mrb[0].mxu0
      %595 = vmatprep.mubr.bf16.mxu0 0
      %596 = vmatmul.mubr.bf16.gmra.mrb[0].mxu0 %v530
      %v597 = vpop.f32.mrb[0].mxu0
      %v598 = vadd.f32 %v470, %v597
      %v599 = vpop.f32.mrb[0].mxu0
      %v600 = vpop.f32.mrb[0].mxu0
      %v601 = vadd.f32 %v471, %v600
      %v602 = vpop.f32.mrb[0].mxu0
      %603 = vmatprep.mubr.bf16.mxu0 0
      %604 = vmatmul.mubr.bf16.gmra.mrb[0].mxu0 %v533
      %v605 = vpop.f32.mrb[0].mxu0
      %v606 = vadd.f32 %v472, %v605
      %v607 = vpop.f32.mrb[0].mxu0
      %v608 = vpop.f32.mrb[0].mxu0
      %v609 = vadd.f32 %v473, %v608
      %v610 = vpop.f32.mrb[0].mxu0
      %611 = vmatprep.mubr.bf16.mxu0 0
      %612 = vmatmul.mubr.bf16.gmra.mrb[0].mxu0 %v536
      %v613 = vpop.f32.mrb[0].mxu0
      %v614 = vadd.f32 %v474, %v613
      %v615 = vpop.f32.mrb[0].mxu0
      %v616 = vpop.f32.mrb[0].mxu0
      %v617 = vadd.f32 %v475, %v616
      %v618 = vpop.f32.mrb[0].mxu0
      %619 = vmatprep.mubr.bf16.mxu0 0
      %620 = vmatmul.mubr.bf16.gmra.mrb[0].mxu0 %v539
      %v621 = vpop.f32.mrb[0].mxu0
      %v622 = vadd.f32 %v476, %v621
      %v623 = vpop.f32.mrb[0].mxu0
      %v624 = vpop.f32.mrb[0].mxu0
      %v625 = vadd.f32 %v477, %v624
      %v626 = vpop.f32.mrb[0].mxu0
      %627 = vmatprep.mubr.bf16.mxu0 0
      %628 = vmatmul.mubr.bf16.gmra.mrb[0].mxu0 %v542
      %v629 = vpop.f32.mrb[0].mxu0
      %v630 = vadd.f32 %v478, %v629
      %v631 = vpop.f32.mrb[0].mxu0
      %v632 = vpop.f32.mrb[0].mxu0
      %v633 = vadd.f32 %v479, %v632
      %v634 = vpop.f32.mrb[0].mxu0
      %635 = vmatprep.mubr.bf16.mxu0 0
      %636 = vmatmul.mubr.bf16.gmra.mrb[0].mxu0 %v545
      %v637 = vpop.f32.mrb[0].mxu0
      %v638 = vadd.f32 %v480, %v637
      %v639 = vpop.f32.mrb[0].mxu0
      %v640 = vpop.f32.mrb[0].mxu0
      %v641 = vadd.f32 %v481, %v640
      %v642 = vpop.f32.mrb[0].mxu0
      %643 = vdwg.mxu0
      %v644 = vsub.f32 0.0, %v582
      %v645 = vsub.f32 0.0, %v585
      %v646 = vsub.f32 0.0, %v590
      %v647 = vsub.f32 0.0, %v593
      %v648 = vsub.f32 0.0, %v598
      %v649 = vsub.f32 0.0, %v601
      %v650 = vsub.f32 0.0, %v606
      %v651 = vsub.f32 0.0, %v609
      %v652 = vsub.f32 0.0, %v614
      %v653 = vsub.f32 0.0, %v617
      %v654 = vsub.f32 0.0, %v622
      %v655 = vsub.f32 0.0, %v625
      %v656 = vsub.f32 0.0, %v630
      %v657 = vsub.f32 0.0, %v633
      %v658 = vsub.f32 0.0, %v638
      %v659 = vsub.f32 0.0, %v641
      %v660 = vmul.f32 %v644, 1.442695
      %v661 = vpow.pop %v660
      %v662 = vmul.f32 %v645, 1.442695
      %v663 = vpow.pop %v662
      %v664 = vmul.f32 %v646, 1.442695
      %v665 = vpow.pop %v664
      %v666 = vmul.f32 %v647, 1.442695
      %v667 = vpow.pop %v666
      %v668 = vmul.f32 %v648, 1.442695
      %v669 = vpow.pop %v668
      %v670 = vmul.f32 %v649, 1.442695
      %v671 = vpow.pop %v670
      %v672 = vmul.f32 %v650, 1.442695
      %v673 = vpow.pop %v672
      %v674 = vmul.f32 %v651, 1.442695
      %v675 = vpow.pop %v674
      %v676 = vmul.f32 %v652, 1.442695
      %v677 = vpow.pop %v676
      %v678 = vmul.f32 %v653, 1.442695
      %v679 = vpow.pop %v678
      %v680 = vmul.f32 %v654, 1.442695
      %v681 = vpow.pop %v680
      %v682 = vmul.f32 %v655, 1.442695
      %v683 = vpow.pop %v682
      %v684 = vmul.f32 %v656, 1.442695
      %v685 = vpow.pop %v684
      %v686 = vmul.f32 %v657, 1.442695
      %v687 = vpow.pop %v686
      %v688 = vmul.f32 %v658, 1.442695
      %v689 = vpow.pop %v688
      %v690 = vmul.f32 %v659, 1.442695
      %v691 = vpow.pop %v690
      %v692 = vadd.f32 %v661, 1.0
      %v693 = vadd.f32 %v663, 1.0
      %v694 = vadd.f32 %v665, 1.0
      %v695 = vadd.f32 %v667, 1.0
      %v696 = vadd.f32 %v669, 1.0
      %v697 = vadd.f32 %v671, 1.0
      %v698 = vadd.f32 %v673, 1.0
      %v699 = vadd.f32 %v675, 1.0
      %v700 = vadd.f32 %v677, 1.0
      %v701 = vadd.f32 %v679, 1.0
      %v702 = vadd.f32 %v681, 1.0
      %v703 = vadd.f32 %v683, 1.0
      %v704 = vadd.f32 %v685, 1.0
      %v705 = vadd.f32 %v687, 1.0
      %v706 = vadd.f32 %v689, 1.0
      %v707 = vadd.f32 %v691, 1.0
      %v708 = vrcp.pop %v692
      %v709 = vrcp.pop %v693
      %v710 = vrcp.pop %v694
      %v711 = vrcp.pop %v695
      %v712 = vrcp.pop %v696
      %v713 = vrcp.pop %v697
      %v714 = vrcp.pop %v698
      %v715 = vrcp.pop %v699
      %v716 = vrcp.pop %v700
      %v717 = vrcp.pop %v701
      %v718 = vrcp.pop %v702
      %v719 = vrcp.pop %v703
      %v720 = vrcp.pop %v704
      %v721 = vrcp.pop %v705
      %v722 = vrcp.pop %v706
      %v723 = vrcp.pop %v707
      %725 = vset.pattern.permute.xlu0 0
      %726 = vperm.xlu0 %725, %v708
      %v727 = vpop.permute.xlu0 %726
      %730 = vset.pattern.permute.xlu0 0
      %731 = vperm.xlu0 %730, %v709
      %v732 = vpop.permute.xlu0 %731
      %735 = vset.pattern.permute.xlu0 0
      %736 = vperm.xlu0 %735, %v710
      %v737 = vpop.permute.xlu0 %736
      %740 = vset.pattern.permute.xlu0 0
      %741 = vperm.xlu0 %740, %v711
      %v742 = vpop.permute.xlu0 %741
      %745 = vset.pattern.permute.xlu0 0
      %746 = vperm.xlu0 %745, %v712
      %v747 = vpop.permute.xlu0 %746
      %750 = vset.pattern.permute.xlu0 0
      %751 = vperm.xlu0 %750, %v713
      %v752 = vpop.permute.xlu0 %751
      %755 = vset.pattern.permute.xlu0 0
      %756 = vperm.xlu0 %755, %v714
      %v757 = vpop.permute.xlu0 %756
      %760 = vset.pattern.permute.xlu0 0
      %761 = vperm.xlu0 %760, %v715
      %v762 = vpop.permute.xlu0 %761
      %765 = vset.pattern.permute.xlu0 0
      %766 = vperm.xlu0 %765, %v716
      %v767 = vpop.permute.xlu0 %766
      %770 = vset.pattern.permute.xlu0 0
      %771 = vperm.xlu0 %770, %v717
      %v772 = vpop.permute.xlu0 %771
      %775 = vset.pattern.permute.xlu0 0
      %776 = vperm.xlu0 %775, %v718
      %v777 = vpop.permute.xlu0 %776
      %780 = vset.pattern.permute.xlu0 0
      %781 = vperm.xlu0 %780, %v719
      %v782 = vpop.permute.xlu0 %781
      %785 = vset.pattern.permute.xlu0 0
      %786 = vperm.xlu0 %785, %v720
      %v787 = vpop.permute.xlu0 %786
      %790 = vset.pattern.permute.xlu0 0
      %791 = vperm.xlu0 %790, %v721
      %v792 = vpop.permute.xlu0 %791
      %795 = vset.pattern.permute.xlu0 0
      %796 = vperm.xlu0 %795, %v722
      %v797 = vpop.permute.xlu0 %796
      %800 = vset.pattern.permute.xlu0 0
      %801 = vperm.xlu0 %800, %v723
      %v802 = vpop.permute.xlu0 %801
      %v804 = vmul.f32 %v308, %v727
      %v805 = vmul.f32 %v309, %v727
      %v806 = vmul.f32 %v310, %v732
      %v807 = vmul.f32 %v311, %v732
      %v808 = vmul.f32 %v312, %v737
      %v809 = vmul.f32 %v313, %v737
      %v810 = vmul.f32 %v314, %v742
      %v811 = vmul.f32 %v315, %v742
      %v812 = vmul.f32 %v316, %v747
      %v813 = vmul.f32 %v317, %v747
      %v814 = vmul.f32 %v318, %v752
      %v815 = vmul.f32 %v319, %v752
      %v816 = vmul.f32 %v320, %v757
      %v817 = vmul.f32 %v321, %v757
      %v818 = vmul.f32 %v322, %v762
      %v819 = vmul.f32 %v323, %v762
      %v820 = vmul.f32 %v324, %v767
      %v821 = vmul.f32 %v325, %v767
      %v822 = vmul.f32 %v326, %v772
      %v823 = vmul.f32 %v327, %v772
      %v824 = vmul.f32 %v328, %v777
      %v825 = vmul.f32 %v329, %v777
      %v826 = vmul.f32 %v330, %v782
      %v827 = vmul.f32 %v331, %v782
      %v828 = vmul.f32 %v332, %v787
      %v829 = vmul.f32 %v333, %v787
      %v830 = vmul.f32 %v334, %v792
      %v831 = vmul.f32 %v335, %v792
      %v832 = vmul.f32 %v336, %v797
      %v833 = vmul.f32 %v337, %v797
      %v834 = vmul.f32 %v338, %v802
      %v835 = vmul.f32 %v339, %v802
      %v836 = vadd.f32 %v804, %v806
      %v837 = vadd.f32 %v836, %v808
      %v838 = vadd.f32 %v837, %v810
      %v839 = vadd.f32 %v838, %v812
      %v840 = vadd.f32 %v839, %v814
      %v841 = vadd.f32 %v840, %v816
      %v842 = vadd.f32 %v841, %v818
      %v843 = vadd.f32 %v842, %v820
      %v844 = vadd.f32 %v843, %v822
      %v845 = vadd.f32 %v844, %v824
      %v846 = vadd.f32 %v845, %v826
      %v847 = vadd.f32 %v846, %v828
      %v848 = vadd.f32 %v847, %v830
      %v849 = vadd.f32 %v848, %v832
      %v850 = vadd.f32 %v849, %v834
      %v851 = vrot.slane %v850, 4
      %v852 = vadd.f32 %v850, %v851
      %v853 = vrot.slane %v852, 2
      %v854 = vadd.f32 %v852, %v853
      %v855 = vrot.slane %v854, 1
      %v856 = vadd.f32 %v854, %v855
      %v857 = vadd.f32 %v805, %v807
      %v858 = vadd.f32 %v857, %v809
      %v859 = vadd.f32 %v858, %v811
      %v860 = vadd.f32 %v859, %v813
      %v861 = vadd.f32 %v860, %v815
      %v862 = vadd.f32 %v861, %v817
      %v863 = vadd.f32 %v862, %v819
      %v864 = vadd.f32 %v863, %v821
      %v865 = vadd.f32 %v864, %v823
      %v866 = vadd.f32 %v865, %v825
      %v867 = vadd.f32 %v866, %v827
      %v868 = vadd.f32 %v867, %v829
      %v869 = vadd.f32 %v868, %v831
      %v870 = vadd.f32 %v869, %v833
      %v871 = vadd.f32 %v870, %v835
      %v872 = vrot.slane %v871, 4
      %v873 = vadd.f32 %v871, %v872
      %v874 = vrot.slane %v873, 2
      %v875 = vadd.f32 %v873, %v874
      %v876 = vrot.slane %v875, 1
      %v877 = vadd.f32 %v875, %v876
      %v878 = vmax.f32 %v804, %v808
      %v879 = vmax.f32 %v806, %v810
      %v880 = vmax.f32 %v878, %v812
      %v881 = vmax.f32 %v879, %v814
      %v882 = vmax.f32 %v880, %v816
      %v883 = vmax.f32 %v881, %v818
      %v884 = vmax.f32 %v882, %v820
      %v885 = vmax.f32 %v883, %v822
      %v886 = vmax.f32 %v884, %v824
      %v887 = vmax.f32 %v885, %v826
      %v888 = vmax.f32 %v886, %v828
      %v889 = vmax.f32 %v887, %v830
      %v890 = vmax.f32 %v888, %v832
      %v891 = vmax.f32 %v889, %v834
      %v892 = vmax.f32 %v890, %v891
      %v893 = vrot.slane %v892, 4
      %v894 = vmax.f32 %v892, %v893
      %v895 = vrot.slane %v894, 2
      %v896 = vmax.f32 %v894, %v895
      %v897 = vrot.slane %v896, 1
      %v898 = vmax.f32 %v896, %v897
      %v899 = vmax.f32 %v805, %v809
      %v900 = vmax.f32 %v807, %v811
      %v901 = vmax.f32 %v899, %v813
      %v902 = vmax.f32 %v900, %v815
      %v903 = vmax.f32 %v901, %v817
      %v904 = vmax.f32 %v902, %v819
      %v905 = vmax.f32 %v903, %v821
      %v906 = vmax.f32 %v904, %v823
      %v907 = vmax.f32 %v905, %v825
      %v908 = vmax.f32 %v906, %v827
      %v909 = vmax.f32 %v907, %v829
      %v910 = vmax.f32 %v908, %v831
      %v911 = vmax.f32 %v909, %v833
      %v912 = vmax.f32 %v910, %v835
      %v913 = vmax.f32 %v911, %v912
      %v914 = vrot.slane %v913, 4
      %v915 = vmax.f32 %v913, %v914
      %v916 = vrot.slane %v915, 2
      %v917 = vmax.f32 %v915, %v916
      %v918 = vrot.slane %v917, 1
      %v919 = vmax.f32 %v917, %v918
      %v920 = vpack.c.bf16 %v856, %v856
      %v921 = vpack.c.bf16 %v877, %v877
      %v922 = vld [vmem:[%s5] sm:$0xff]
      %v923 = vld [vmem:[%s5 + $0x8] sm:$0xff]
      %v924 = vld [vmem:[%s5 + $0x10] sm:$0xff]
      %v925 = vld [vmem:[%s5 + $0x18] sm:$0xff]
      %v926 = vld [vmem:[%s5 + $0x20] sm:$0xff]
      %v927 = vld [vmem:[%s5 + $0x28] sm:$0xff]
      %v928 = vld [vmem:[%s5 + $0x30] sm:$0xff]
      %v929 = vld [vmem:[%s5 + $0x38] sm:$0xff]
      %v930 = vld [vmem:[%s5 + $0x40] sm:$0xff]
      %v931 = vld [vmem:[%s5 + $0x48] sm:$0xff]
      %v932 = vld [vmem:[%s5 + $0x50] sm:$0xff]
      %v933 = vld [vmem:[%s5 + $0x58] sm:$0xff]
      %v934 = vld [vmem:[%s5 + $0x60] sm:$0xff]
      %v935 = vld [vmem:[%s5 + $0x68] sm:$0xff]
      %v936 = vld [vmem:[%s5 + $0x70] sm:$0xff]
      %v937 = vld [vmem:[%s5 + $0x78] sm:$0xff]
      %v938 = vld [vmem:[%s5 + $0x80] sm:$0xff]
      %v939 = vld [vmem:[%s5 + $0x88] sm:$0xff]
      %v940 = vld [vmem:[%s5 + $0x90] sm:$0xff]
      %v941 = vld [vmem:[%s5 + $0x98] sm:$0xff]
      %v942 = vld [vmem:[%s5 + $0xa0] sm:$0xff]
      %v943 = vld [vmem:[%s5 + $0xa8] sm:$0xff]
      %v944 = vld [vmem:[%s5 + $0xb0] sm:$0xff]
      %v945 = vld [vmem:[%s5 + $0xb8] sm:$0xff]
      %v946 = vld [vmem:[%s5 + $0xc0] sm:$0xff]
      %v947 = vld [vmem:[%s5 + $0xc8] sm:$0xff]
      %v948 = vld [vmem:[%s5 + $0xd0] sm:$0xff]
      %v949 = vld [vmem:[%s5 + $0xd8] sm:$0xff]
      %v950 = vld [vmem:[%s5 + $0xe0] sm:$0xff]
      %v951 = vld [vmem:[%s5 + $0xe8] sm:$0xff]
      %v952 = vld [vmem:[%s5 + $0xf0] sm:$0xff]
      %v953 = vld [vmem:[%s5 + $0xf8] sm:$0xff]
      %v954 = vpack.c.bf16 %v898, %v898
      %v955 = vpack.c.bf16 %v919, %v919
      %v956 = vld [vmem:[%s6] sm:$0xff]
      %v957 = vld [vmem:[%s6 + $0x8] sm:$0xff]
      %v958 = vld [vmem:[%s6 + $0x10] sm:$0xff]
      %v959 = vld [vmem:[%s6 + $0x18] sm:$0xff]
      %v960 = vld [vmem:[%s6 + $0x20] sm:$0xff]
      %v961 = vld [vmem:[%s6 + $0x28] sm:$0xff]
      %v962 = vld [vmem:[%s6 + $0x30] sm:$0xff]
      %v963 = vld [vmem:[%s6 + $0x38] sm:$0xff]
      %v964 = vld [vmem:[%s6 + $0x40] sm:$0xff]
      %v965 = vld [vmem:[%s6 + $0x48] sm:$0xff]
      %v966 = vld [vmem:[%s6 + $0x50] sm:$0xff]
      %v967 = vld [vmem:[%s6 + $0x58] sm:$0xff]
      %v968 = vld [vmem:[%s6 + $0x60] sm:$0xff]
      %v969 = vld [vmem:[%s6 + $0x68] sm:$0xff]
      %v970 = vld [vmem:[%s6 + $0x70] sm:$0xff]
      %v971 = vld [vmem:[%s6 + $0x78] sm:$0xff]
      %v972 = vld [vmem:[%s6 + $0x80] sm:$0xff]
      %v973 = vld [vmem:[%s6 + $0x88] sm:$0xff]
      %v974 = vld [vmem:[%s6 + $0x90] sm:$0xff]
      %v975 = vld [vmem:[%s6 + $0x98] sm:$0xff]
      %v976 = vld [vmem:[%s6 + $0xa0] sm:$0xff]
      %v977 = vld [vmem:[%s6 + $0xa8] sm:$0xff]
      %v978 = vld [vmem:[%s6 + $0xb0] sm:$0xff]
      %v979 = vld [vmem:[%s6 + $0xb8] sm:$0xff]
      %v980 = vld [vmem:[%s6 + $0xc0] sm:$0xff]
      %v981 = vld [vmem:[%s6 + $0xc8] sm:$0xff]
      %v982 = vld [vmem:[%s6 + $0xd0] sm:$0xff]
      %v983 = vld [vmem:[%s6 + $0xd8] sm:$0xff]
      %v984 = vld [vmem:[%s6 + $0xe0] sm:$0xff]
      %v985 = vld [vmem:[%s6 + $0xe8] sm:$0xff]
      %v986 = vld [vmem:[%s6 + $0xf0] sm:$0xff]
      %v987 = vld [vmem:[%s6 + $0xf8] sm:$0xff]
      %v1020 = vunpack.c.l.b16 %v956
      %v1021 = vunpack.c.h.b16 %v956
      %v1022 = vunpack.c.l.b16 %v957
      %v1023 = vunpack.c.h.b16 %v957
      %v1024 = vunpack.c.l.b16 %v958
      %v1025 = vunpack.c.h.b16 %v958
      %v1026 = vunpack.c.l.b16 %v959
      %v1027 = vunpack.c.h.b16 %v959
      %v1028 = vunpack.c.l.b16 %v960
      %v1029 = vunpack.c.h.b16 %v960
      %v1030 = vunpack.c.l.b16 %v961
      %v1031 = vunpack.c.h.b16 %v961
      %v1032 = vunpack.c.l.b16 %v962
      %v1033 = vunpack.c.h.b16 %v962
      %v1034 = vunpack.c.l.b16 %v963
      %v1035 = vunpack.c.h.b16 %v963
      %v1036 = vunpack.c.l.b16 %v964
      %v1037 = vunpack.c.h.b16 %v964
      %v1038 = vunpack.c.l.b16 %v965
      %v1039 = vunpack.c.h.b16 %v965
      %v1040 = vunpack.c.l.b16 %v966
      %v1041 = vunpack.c.h.b16 %v966
      %v1042 = vunpack.c.l.b16 %v967
      %v1043 = vunpack.c.h.b16 %v967
      %v1044 = vunpack.c.l.b16 %v968
      %v1045 = vunpack.c.h.b16 %v968
      %v1046 = vunpack.c.l.b16 %v969
      %v1047 = vunpack.c.h.b16 %v969
      %v1048 = vunpack.c.l.b16 %v970
      %v1049 = vunpack.c.h.b16 %v970
      %v1050 = vunpack.c.l.b16 %v971
      %v1051 = vunpack.c.h.b16 %v971
      %v1052 = vunpack.c.l.b16 %v972
      %v1053 = vunpack.c.h.b16 %v972
      %v1054 = vunpack.c.l.b16 %v973
      %v1055 = vunpack.c.h.b16 %v973
      %v1056 = vunpack.c.l.b16 %v974
      %v1057 = vunpack.c.h.b16 %v974
      %v1058 = vunpack.c.l.b16 %v975
      %v1059 = vunpack.c.h.b16 %v975
      %v1060 = vunpack.c.l.b16 %v976
      %v1061 = vunpack.c.h.b16 %v976
      %v1062 = vunpack.c.l.b16 %v977
      %v1063 = vunpack.c.h.b16 %v977
      %v1064 = vunpack.c.l.b16 %v978
      %v1065 = vunpack.c.h.b16 %v978
      %v1066 = vunpack.c.l.b16 %v979
      %v1067 = vunpack.c.h.b16 %v979
      %v1068 = vunpack.c.l.b16 %v980
      %v1069 = vunpack.c.h.b16 %v980
      %v1070 = vunpack.c.l.b16 %v981
      %v1071 = vunpack.c.h.b16 %v981
      %v1072 = vunpack.c.l.b16 %v982
      %v1073 = vunpack.c.h.b16 %v982
      %v1074 = vunpack.c.l.b16 %v983
      %v1075 = vunpack.c.h.b16 %v983
      %v1076 = vunpack.c.l.b16 %v984
      %v1077 = vunpack.c.h.b16 %v984
      %v1078 = vunpack.c.l.b16 %v985
      %v1079 = vunpack.c.h.b16 %v985
      %v1080 = vunpack.c.l.b16 %v986
      %v1081 = vunpack.c.h.b16 %v986
      %v1082 = vunpack.c.l.b16 %v987
      %v1083 = vunpack.c.h.b16 %v987
      %v1084 = vpack.c.b16 %v1022, %v1020
      %v1085 = vpack.c.b16 %v1023, %v1021
      %v1086 = vpack.c.b16 %v1026, %v1024
      %v1087 = vpack.c.b16 %v1027, %v1025
      %v1088 = vpack.c.b16 %v1030, %v1028
      %v1089 = vpack.c.b16 %v1031, %v1029
      %v1090 = vpack.c.b16 %v1034, %v1032
      %v1091 = vpack.c.b16 %v1035, %v1033
      %v1092 = vpack.c.b16 %v1038, %v1036
      %v1093 = vpack.c.b16 %v1039, %v1037
      %v1094 = vpack.c.b16 %v1042, %v1040
      %v1095 = vpack.c.b16 %v1043, %v1041
      %v1096 = vpack.c.b16 %v1046, %v1044
      %v1097 = vpack.c.b16 %v1047, %v1045
      %v1098 = vpack.c.b16 %v1050, %v1048
      %v1099 = vpack.c.b16 %v1051, %v1049
      %v1100 = vpack.c.b16 %v1054, %v1052
      %v1101 = vpack.c.b16 %v1055, %v1053
      %v1102 = vpack.c.b16 %v1058, %v1056
      %v1103 = vpack.c.b16 %v1059, %v1057
      %v1104 = vpack.c.b16 %v1062, %v1060
      %v1105 = vpack.c.b16 %v1063, %v1061
      %v1106 = vpack.c.b16 %v1066, %v1064
      %v1107 = vpack.c.b16 %v1067, %v1065
      %v1108 = vpack.c.b16 %v1070, %v1068
      %v1109 = vpack.c.b16 %v1071, %v1069
      %v1110 = vpack.c.b16 %v1074, %v1072
      %v1111 = vpack.c.b16 %v1075, %v1073
      %v1112 = vpack.c.b16 %v1078, %v1076
      %v1113 = vpack.c.b16 %v1079, %v1077
      %v1114 = vpack.c.b16 %v1082, %v1080
      %v1115 = vpack.c.b16 %v1083, %v1081
      %1148 = vmatprep.subr.bf16.mxu0 %v1085
      %1149 = vmatpush1.bf16.msra.mxu0 %v1084
      %1150 = vmatprep.subr.bf16.mxu0 %v1087
      %1151 = vmatpush1.bf16.msra.mxu0 %v1086
      %1152 = vmatprep.subr.bf16.mxu0 %v1089
      %1153 = vmatpush1.bf16.msra.mxu0 %v1088
      %1154 = vmatprep.subr.bf16.mxu0 %v1091
      %1155 = vmatpush1.bf16.msra.mxu0 %v1090
      %1156 = vmatprep.subr.bf16.mxu0 %v1093
      %1157 = vmatpush1.bf16.msra.mxu0 %v1092
      %1158 = vmatprep.subr.bf16.mxu0 %v1095
      %1159 = vmatpush1.bf16.msra.mxu0 %v1094
      %1160 = vmatprep.subr.bf16.mxu0 %v1097
      %1161 = vmatpush1.bf16.msra.mxu0 %v1096
      %1162 = vmatprep.subr.bf16.mxu0 %v1099
      %1163 = vmatpush1.bf16.msra.mxu0 %v1098
      %1164 = vmatprep.subr.bf16.mxu0 %v1101
      %1165 = vmatpush1.bf16.msra.mxu0 %v1100
      %1166 = vmatprep.subr.bf16.mxu0 %v1103
      %1167 = vmatpush1.bf16.msra.mxu0 %v1102
      %1168 = vmatprep.subr.bf16.mxu0 %v1105
      %1169 = vmatpush1.bf16.msra.mxu0 %v1104
      %1170 = vmatprep.subr.bf16.mxu0 %v1107
      %1171 = vmatpush1.bf16.msra.mxu0 %v1106
      %1172 = vmatprep.subr.bf16.mxu0 %v1109
      %1173 = vmatpush1.bf16.msra.mxu0 %v1108
      %1174 = vmatprep.subr.bf16.mxu0 %v1111
      %1175 = vmatpush1.bf16.msra.mxu0 %v1110
      %1176 = vmatprep.subr.bf16.mxu0 %v1113
      %1177 = vmatpush1.bf16.msra.mxu0 %v1112
      %1178 = vmatprep.subr.bf16.mxu0 %v1115
      %1179 = vmatpush1.bf16.msra.mxu0 %v1114
      %1180 = vmatprep.mubr.bf16.mxu0 %v955
      %1181 = vmatmul.mubr.bf16.gmra.mrb[0].mxu0 %v954
      %v1182 = vpop.f32.mrb[0].mxu0
      %v1183 = vadd.f32 0.0, %v1182
      %v1184 = vpop.f32.mrb[0].mxu0
      %v1185 = vadd.f32 0.0, %v1184
      %v1186 = vpop.f32.mrb[0].mxu0
      %v1187 = vpop.f32.mrb[0].mxu0
      %1188 = vdwg.mxu0
      %v1221 = vunpack.c.l.b16 %v922
      %v1222 = vunpack.c.h.b16 %v922
      %v1223 = vunpack.c.l.b16 %v923
      %v1224 = vunpack.c.h.b16 %v923
      %v1225 = vunpack.c.l.b16 %v924
      %v1226 = vunpack.c.h.b16 %v924
      %v1227 = vunpack.c.l.b16 %v925
      %v1228 = vunpack.c.h.b16 %v925
      %v1229 = vunpack.c.l.b16 %v926
      %v1230 = vunpack.c.h.b16 %v926
      %v1231 = vunpack.c.l.b16 %v927
      %v1232 = vunpack.c.h.b16 %v927
      %v1233 = vunpack.c.l.b16 %v928
      %v1234 = vunpack.c.h.b16 %v928
      %v1235 = vunpack.c.l.b16 %v929
      %v1236 = vunpack.c.h.b16 %v929
      %v1237 = vunpack.c.l.b16 %v930
      %v1238 = vunpack.c.h.b16 %v930
      %v1239 = vunpack.c.l.b16 %v931
      %v1240 = vunpack.c.h.b16 %v931
      %v1241 = vunpack.c.l.b16 %v932
      %v1242 = vunpack.c.h.b16 %v932
      %v1243 = vunpack.c.l.b16 %v933
      %v1244 = vunpack.c.h.b16 %v933
      %v1245 = vunpack.c.l.b16 %v934
      %v1246 = vunpack.c.h.b16 %v934
      %v1247 = vunpack.c.l.b16 %v935
      %v1248 = vunpack.c.h.b16 %v935
      %v1249 = vunpack.c.l.b16 %v936
      %v1250 = vunpack.c.h.b16 %v936
      %v1251 = vunpack.c.l.b16 %v937
      %v1252 = vunpack.c.h.b16 %v937
      %v1253 = vunpack.c.l.b16 %v938
      %v1254 = vunpack.c.h.b16 %v938
      %v1255 = vunpack.c.l.b16 %v939
      %v1256 = vunpack.c.h.b16 %v939
      %v1257 = vunpack.c.l.b16 %v940
      %v1258 = vunpack.c.h.b16 %v940
      %v1259 = vunpack.c.l.b16 %v941
      %v1260 = vunpack.c.h.b16 %v941
      %v1261 = vunpack.c.l.b16 %v942
      %v1262 = vunpack.c.h.b16 %v942
      %v1263 = vunpack.c.l.b16 %v943
      %v1264 = vunpack.c.h.b16 %v943
      %v1265 = vunpack.c.l.b16 %v944
      %v1266 = vunpack.c.h.b16 %v944
      %v1267 = vunpack.c.l.b16 %v945
      %v1268 = vunpack.c.h.b16 %v945
      %v1269 = vunpack.c.l.b16 %v946
      %v1270 = vunpack.c.h.b16 %v946
      %v1271 = vunpack.c.l.b16 %v947
      %v1272 = vunpack.c.h.b16 %v947
      %v1273 = vunpack.c.l.b16 %v948
      %v1274 = vunpack.c.h.b16 %v948
      %v1275 = vunpack.c.l.b16 %v949
      %v1276 = vunpack.c.h.b16 %v949
      %v1277 = vunpack.c.l.b16 %v950
      %v1278 = vunpack.c.h.b16 %v950
      %v1279 = vunpack.c.l.b16 %v951
      %v1280 = vunpack.c.h.b16 %v951
      %v1281 = vunpack.c.l.b16 %v952
      %v1282 = vunpack.c.h.b16 %v952
      %v1283 = vunpack.c.l.b16 %v953
      %v1284 = vunpack.c.h.b16 %v953
      %v1285 = vpack.c.b16 %v1223, %v1221
      %v1286 = vpack.c.b16 %v1224, %v1222
      %v1287 = vpack.c.b16 %v1227, %v1225
      %v1288 = vpack.c.b16 %v1228, %v1226
      %v1289 = vpack.c.b16 %v1231, %v1229
      %v1290 = vpack.c.b16 %v1232, %v1230
      %v1291 = vpack.c.b16 %v1235, %v1233
      %v1292 = vpack.c.b16 %v1236, %v1234
      %v1293 = vpack.c.b16 %v1239, %v1237
      %v1294 = vpack.c.b16 %v1240, %v1238
      %v1295 = vpack.c.b16 %v1243, %v1241
      %v1296 = vpack.c.b16 %v1244, %v1242
      %v1297 = vpack.c.b16 %v1247, %v1245
      %v1298 = vpack.c.b16 %v1248, %v1246
      %v1299 = vpack.c.b16 %v1251, %v1249
      %v1300 = vpack.c.b16 %v1252, %v1250
      %v1301 = vpack.c.b16 %v1255, %v1253
      %v1302 = vpack.c.b16 %v1256, %v1254
      %v1303 = vpack.c.b16 %v1259, %v1257
      %v1304 = vpack.c.b16 %v1260, %v1258
      %v1305 = vpack.c.b16 %v1263, %v1261
      %v1306 = vpack.c.b16 %v1264, %v1262
      %v1307 = vpack.c.b16 %v1267, %v1265
      %v1308 = vpack.c.b16 %v1268, %v1266
      %v1309 = vpack.c.b16 %v1271, %v1269
      %v1310 = vpack.c.b16 %v1272, %v1270
      %v1311 = vpack.c.b16 %v1275, %v1273
      %v1312 = vpack.c.b16 %v1276, %v1274
      %v1313 = vpack.c.b16 %v1279, %v1277
      %v1314 = vpack.c.b16 %v1280, %v1278
      %v1315 = vpack.c.b16 %v1283, %v1281
      %v1316 = vpack.c.b16 %v1284, %v1282
      %1349 = vmatprep.subr.bf16.mxu0 %v1286
      %1350 = vmatpush1.bf16.msra.mxu0 %v1285
      %1351 = vmatprep.subr.bf16.mxu0 %v1288
      %1352 = vmatpush1.bf16.msra.mxu0 %v1287
      %1353 = vmatprep.subr.bf16.mxu0 %v1290
      %1354 = vmatpush1.bf16.msra.mxu0 %v1289
      %1355 = vmatprep.subr.bf16.mxu0 %v1292
      %1356 = vmatpush1.bf16.msra.mxu0 %v1291
      %1357 = vmatprep.subr.bf16.mxu0 %v1294
      %1358 = vmatpush1.bf16.msra.mxu0 %v1293
      %1359 = vmatprep.subr.bf16.mxu0 %v1296
      %1360 = vmatpush1.bf16.msra.mxu0 %v1295
      %1361 = vmatprep.subr.bf16.mxu0 %v1298
      %1362 = vmatpush1.bf16.msra.mxu0 %v1297
      %1363 = vmatprep.subr.bf16.mxu0 %v1300
      %1364 = vmatpush1.bf16.msra.mxu0 %v1299
      %1365 = vmatprep.subr.bf16.mxu0 %v1302
      %1366 = vmatpush1.bf16.msra.mxu0 %v1301
      %1367 = vmatprep.subr.bf16.mxu0 %v1304
      %1368 = vmatpush1.bf16.msra.mxu0 %v1303
      %1369 = vmatprep.subr.bf16.mxu0 %v1306
      %1370 = vmatpush1.bf16.msra.mxu0 %v1305
      %1371 = vmatprep.subr.bf16.mxu0 %v1308
      %1372 = vmatpush1.bf16.msra.mxu0 %v1307
      %1373 = vmatprep.subr.bf16.mxu0 %v1310
      %1374 = vmatpush1.bf16.msra.mxu0 %v1309
      %1375 = vmatprep.subr.bf16.mxu0 %v1312
      %1376 = vmatpush1.bf16.msra.mxu0 %v1311
      %1377 = vmatprep.subr.bf16.mxu0 %v1314
      %1378 = vmatpush1.bf16.msra.mxu0 %v1313
      %1379 = vmatprep.subr.bf16.mxu0 %v1316
      %1380 = vmatpush1.bf16.msra.mxu0 %v1315
      %1381 = vmatprep.mubr.bf16.mxu0 %v921
      %1382 = vmatmul.mubr.bf16.gmra.mrb[0].mxu0 %v920
      %v1383 = vpop.f32.mrb[0].mxu0
      %v1384 = vadd.f32 %v1183, %v1383
      %v1385 = vpop.f32.mrb[0].mxu0
      %v1386 = vadd.f32 %v1185, %v1385
      %v1387 = vpop.f32.mrb[0].mxu0
      %v1388 = vpop.f32.mrb[0].mxu0
      %1389 = vdwg.mxu0
      %s1390 = sld [smem:[#allocation2]]
      %v1391 = vstv %s1390
      %v1392 = vadd.f32 %v1384, %v1391
      %v1393 = vadd.f32 %v1386, %v1391
      %v1394 = vsub.f32 0.0, %v1392
      %v1395 = vsub.f32 0.0, %v1393
      %v1396 = vmul.f32 %v1394, 1.442695
      %v1397 = vpow.pop %v1396
      %v1398 = vmul.f32 %v1395, 1.442695
      %v1399 = vpow.pop %v1398
      %v1400 = vadd.f32 %v1397, 1.0
      %v1401 = vadd.f32 %v1399, 1.0
      %v1402 = vrcp.pop %v1400
      %v1403 = vrcp.pop %v1401
      %v1404 = vlaneseq
      %v1405 = vshrl.u32 %v1404, 7
      %v1406 = vsub.s32 0, %v1405
      %v1407 = vrot.slane %v1402, %v1406
      %v1408 = vlaneseq
      %v1409 = vshrl.u32 %v1408, 7
      %v1410 = vsub.s32 0, %v1409
      %v1411 = vrot.slane %v1403, %v1410
      %v1412 = vmul.f32 %v804, %v1407
      %v1413 = vmul.f32 %v805, %v1411
      %v1414 = vmul.f32 %v806, %v1407
      %v1415 = vmul.f32 %v807, %v1411
      %v1416 = vmul.f32 %v808, %v1407
      %v1417 = vmul.f32 %v809, %v1411
      %v1418 = vmul.f32 %v810, %v1407
      %v1419 = vmul.f32 %v811, %v1411
      %v1420 = vmul.f32 %v812, %v1407
      %v1421 = vmul.f32 %v813, %v1411
      %v1422 = vmul.f32 %v814, %v1407
      %v1423 = vmul.f32 %v815, %v1411
      %v1424 = vmul.f32 %v816, %v1407
      %v1425 = vmul.f32 %v817, %v1411
      %v1426 = vmul.f32 %v818, %v1407
      %v1427 = vmul.f32 %v819, %v1411
      %v1428 = vmul.f32 %v820, %v1407
      %v1429 = vmul.f32 %v821, %v1411
      %v1430 = vmul.f32 %v822, %v1407
      %v1431 = vmul.f32 %v823, %v1411
      %v1432 = vmul.f32 %v824, %v1407
      %v1433 = vmul.f32 %v825, %v1411
      %v1434 = vmul.f32 %v826, %v1407
      %v1435 = vmul.f32 %v827, %v1411
      %v1436 = vmul.f32 %v828, %v1407
      %v1437 = vmul.f32 %v829, %v1411
      %v1438 = vmul.f32 %v830, %v1407
      %v1439 = vmul.f32 %v831, %v1411
      %v1440 = vmul.f32 %v832, %v1407
      %v1441 = vmul.f32 %v833, %v1411
      %v1442 = vmul.f32 %v834, %v1407
      %v1443 = vmul.f32 %v835, %v1411
      %1444 = vst [vmem:[%s306] sm:$0xff] %v1412
      %1445 = vst [vmem:[%s306 + $0x8] sm:$0xff] %v1413
      %1446 = vst [vmem:[%s306 + $0x10] sm:$0xff] %v1414
      %1447 = vst [vmem:[%s306 + $0x18] sm:$0xff] %v1415
      %1448 = vst [vmem:[%s306 + $0x20] sm:$0xff] %v1416
      %1449 = vst [vmem:[%s306 + $0x28] sm:$0xff] %v1417
      %1450 = vst [vmem:[%s306 + $0x30] sm:$0xff] %v1418
      %1451 = vst [vmem:[%s306 + $0x38] sm:$0xff] %v1419
      %1452 = vst [vmem:[%s306 + $0x40] sm:$0xff] %v1420
      %1453 = vst [vmem:[%s306 + $0x48] sm:$0xff] %v1421
      %1454 = vst [vmem:[%s306 + $0x50] sm:$0xff] %v1422
      %1455 = vst [vmem:[%s306 + $0x58] sm:$0xff] %v1423
      %1456 = vst [vmem:[%s306 + $0x60] sm:$0xff] %v1424
      %1457 = vst [vmem:[%s306 + $0x68] sm:$0xff] %v1425
      %1458 = vst [vmem:[%s306 + $0x70] sm:$0xff] %v1426
      %1459 = vst [vmem:[%s306 + $0x78] sm:$0xff] %v1427
      %1460 = vst [vmem:[%s306 + $0x80] sm:$0xff] %v1428
      %1461 = vst [vmem:[%s306 + $0x88] sm:$0xff] %v1429
      %1462 = vst [vmem:[%s306 + $0x90] sm:$0xff] %v1430
      %1463 = vst [vmem:[%s306 + $0x98] sm:$0xff] %v1431
      %1464 = vst [vmem:[%s306 + $0xa0] sm:$0xff] %v1432
      %1465 = vst [vmem:[%s306 + $0xa8] sm:$0xff] %v1433
      %1466 = vst [vmem:[%s306 + $0xb0] sm:$0xff] %v1434
      %1467 = vst [vmem:[%s306 + $0xb8] sm:$0xff] %v1435
      %1468 = vst [vmem:[%s306 + $0xc0] sm:$0xff] %v1436
      %1469 = vst [vmem:[%s306 + $0xc8] sm:$0xff] %v1437
      %1470 = vst [vmem:[%s306 + $0xd0] sm:$0xff] %v1438
      %1471 = vst [vmem:[%s306 + $0xd8] sm:$0xff] %v1439
      %1472 = vst [vmem:[%s306 + $0xe0] sm:$0xff] %v1440
      %1473 = vst [vmem:[%s306 + $0xe8] sm:$0xff] %v1441
      %1474 = vst [vmem:[%s306 + $0xf0] sm:$0xff] %v1442
      %1475 = vst [vmem:[%s306 + $0xf8] sm:$0xff] %v1443
      %p1476 = scmp.lt.s32.totalorder %s20, 1
      %s1477 = scalar_select %p1476, %s20, 1
      %s1478 = smul.addr %s1477, 32
      %s1479 = smul.addr %s1478, 8
      %s1480 = scalar_lea.vmem %s8, %s1479
      // Predicated region
      $region53: #{dam_forward.1} parent=51 // pred_check
        %p1481 = pneg %p211
      $region54: #{dam_forward.1} parent=51 // pred_check_branch
        %1483 = sbr.rel (%p1481) target = $region56
      $region55: #{dam_forward.1} parent=51 // pred_region
        _
      $region56: #{dam_forward.1} parent=51 // pred_fallthru
        _
    $region52: #{dam_forward.1} parent=5 // pred_fallthru
      _
    %p1484 = scmp.le.s32.totalorder 2, %s15
    // Predicated region
    $region57: #{dam_forward.1} parent=5 // pred_check
      %p1485 = pneg %p1484
    $region58: #{dam_forward.1} parent=5 // pred_check_branch
      %1487 = sbr.rel (%p1485) target = $region60
    $region59: #{dam_forward.1} parent=5 // pred_region
      %s1488 = ssub.s32 %s15, 2
      // Predicated region
      $region61: #{dam_forward.1} parent=59 // pred_check
        %p1489 = pneg %p217
      $region62: #{dam_forward.1} parent=59 // pred_check_branch
        %1491 = sbr.rel (%p1489) target = $region64
      $region63: #{dam_forward.1} parent=59 // pred_region
        %p1492 = scmp.lt.s32.totalorder %s21, 1
        %s1493 = scalar_select %p1492, %s21, 1
        %s1494 = smul.addr %s1493, 32
        %s1495 = smul.addr %s1494, 8
        %s1496 = scalar_lea.vmem %s8, %s1495
      $region64: #{dam_forward.1} parent=59 // pred_fallthru
        _
    $region60: #{dam_forward.1} parent=5 // pred_fallthru
      _
  $region6: #{dam_forward.1} parent=0 // loop_footer
    %s19 = sadd.s32 1, %s15
  $region7: #{dam_forward.1} parent=0 // loop_footer_branch
    %14 = sbr.rel target = $region3
  $region8: #{dam_forward.1} parent=0 // loop_exit
    _

</llo_original>
